<compile_context>
chip_gen: v5e
topology: v5e:2x2
jax: 0.10.0
libtpu: 0.0.40
codegen_flags: <defaults>
</compile_context>

<pallas_src>
import jax
import jax.numpy as jnp
from jax.experimental import pallas as pl
from jax.experimental.pallas import tpu as pltpu

K = 7
PAD = K // 2  # 3


def _round_up(x, m):
    return (x + m - 1) // m * m


def spatial_attn_kernel(x_ref, w_ref, o_ref):
    # x_ref: (bt, C, Hp, Wp)  VMEM block (spatially zero-padded input)
    # w_ref: (2*K*K,)         SMEM flat conv weights, layout [in_ch, kh, kw]
    # o_ref: (bt, 1, Hp, Wp)  VMEM output block (valid region is [:H, :W])
    bt, C, Hp, Wp = x_ref.shape
    inv_c = 1.0 / C

    # Hoist every weight scalar read out of the tap loops (single SMEM pass).
    w = [w_ref[i] for i in range(2 * K * K)]

    for b in range(bt):
        x = x_ref[b].astype(jnp.float32)          # (C, Hp, Wp)
        # Channel reductions are over the major axis -> pure VPU elementwise.
        fm_max = jnp.max(x, axis=0)               # (Hp, Wp); zero in the halo
        fm_avg = jnp.sum(x, axis=0) * inv_c       # (Hp, Wp); zero in the halo

        # 7x7 "same" conv: each tap is an XLU roll of the padded map.  The
        # circular wrap reads only zero-halo rows/cols, so it reproduces
        # zero padding exactly.  4 partial accumulators break the dep chain.
        accs = [jnp.zeros((Hp, Wp), jnp.float32) for _ in range(4)]
        t = 0
        for c, fm in enumerate((fm_max, fm_avg)):
            for kh in range(K):
                dh = kh - PAD
                band = fm if dh == 0 else pltpu.roll(fm, (-dh) % Hp, axis=0)
                for kw in range(K):
                    dw = kw - PAD
                    tap = band if dw == 0 else pltpu.roll(band, (-dw) % Wp, axis=1)
                    accs[t % 4] = accs[t % 4] + w[c * K * K + kh * K + kw] * tap
                    t += 1
        acc = (accs[0] + accs[1]) + (accs[2] + accs[3])

        o_ref[b, 0] = jax.nn.sigmoid(acc).astype(o_ref.dtype)


def spatial_attention(x, weight, *, bt=1):
    """x: (B, C, H, W); weight: (1, 2, K, K) conv1 weight (no bias)."""
    B, C, H, W = x.shape
    assert B % bt == 0, (B, bt)

    # Lane/sublane-aligned working shape; the extra rows/cols double as the
    # zero padding of the "same" convolution.
    Hp = _round_up(H + 2 * PAD, 8)
    Wp = _round_up(W + 2 * PAD, 128)

    xp = jnp.pad(x, ((0, 0), (0, 0), (0, Hp - H), (0, Wp - W)))
    w_flat = weight.reshape(-1).astype(jnp.float32)  # (2*K*K,)

    # NOTE: for very large C (real CBAM sizes) add a C grid axis marked
    # "arbitrary" with running max/sum accumulators so one block never exceeds
    # v7x's 64 MiB VMEM; unnecessary at these sizes.
    out_p = pl.pallas_call(
        spatial_attn_kernel,
        out_shape=jax.ShapeDtypeStruct((B, 1, Hp, Wp), x.dtype),
        grid_spec=pltpu.PrefetchScalarGridSpec(
            num_scalar_prefetch=0,
            grid=(B // bt,),
            in_specs=[
                pl.BlockSpec((bt, C, Hp, Wp), lambda b: (b, 0, 0, 0)),
                pl.BlockSpec(memory_space=pltpu.MemorySpace.SMEM),
            ],
            out_specs=pl.BlockSpec((bt, 1, Hp, Wp), lambda b: (b, 0, 0, 0)),
        ),
        compiler_params=pltpu.CompilerParams(
            dimension_semantics=("parallel",)),
    )(xp, w_flat)

    return out_p[:, :, :H, :W]


def spatial_attention_ref(x, weight):
    """Pure-JAX reference of the PyTorch forward (for verification)."""
    max_out = jnp.max(x, axis=1, keepdims=True)
    avg_out = jnp.mean(x, axis=1, keepdims=True)
    cat = jnp.concatenate([max_out, avg_out], axis=1)  # (B, 2, H, W)
    out = jax.lax.conv_general_dilated(
        cat, weight, window_strides=(1, 1), padding=((PAD, PAD), (PAD, PAD)),
        dimension_numbers=("NCHW", "OIHW", "NCHW"))
    return jax.nn.sigmoid(out)


if __name__ == "__main__":
    key = jax.random.PRNGKey(0)
    kx, kw = jax.random.split(key)

    B, C, H, W = 2, 4, 16, 16
    x = jax.random.normal(kx, (B, C, H, W), dtype=jnp.float32)
    # Deterministic synthetic conv1 weight: (out=1, in=2, 7, 7), no bias.
    weight = jax.random.normal(kw, (1, 2, K, K), dtype=jnp.float32) * 0.1

    out = jax.block_until_ready(spatial_attention(x, weight))

    ref = spatial_attention_ref(x, weight)
    assert out.shape == (B, 1, H, W), out.shape
    assert jnp.allclose(out, ref, atol=1e-5, rtol=1e-5), float(
        jnp.max(jnp.abs(out - ref)))

    print("KERNEL_OK")
</pallas_src>

<mosaic_0001>
module attributes {stable_mosaic.version = 11 : i64} {
  func.func @spatial_attn_kernel(%arg0: i32, %arg1: memref<1x4x24x128xf32, #tpu.memory_space<vmem>>, %arg2: memref<98xf32, #tpu.memory_space<smem>>, %arg3: memref<1x1x24x128xf32, #tpu.memory_space<vmem>>) attributes {dimension_semantics = [#tpu.dimension_semantics<parallel>], iteration_bounds = array<i64: 2>, scalar_prefetch = 0 : i64, scratch_operands = 0 : i64, tpu.core_type = #tpu.core_type<tc>, window_params = [{transform_indices = @transform_0, window_bounds = array<i64: 1, 4, 24, 128>}, {transform_indices = @transform_1, window_bounds = array<i64: 98>}, {transform_indices = @transform_2, window_bounds = array<i64: 1, 1, 24, 128>}]} {
    %c0 = arith.constant 0 : index
    %0 = memref.load %arg2[%c0] : memref<98xf32, #tpu.memory_space<smem>>
    %c1 = arith.constant 1 : index
    %1 = memref.load %arg2[%c1] : memref<98xf32, #tpu.memory_space<smem>>
    %c2 = arith.constant 2 : index
    %2 = memref.load %arg2[%c2] : memref<98xf32, #tpu.memory_space<smem>>
    %c3 = arith.constant 3 : index
    %3 = memref.load %arg2[%c3] : memref<98xf32, #tpu.memory_space<smem>>
    %c4 = arith.constant 4 : index
    %4 = memref.load %arg2[%c4] : memref<98xf32, #tpu.memory_space<smem>>
    %c5 = arith.constant 5 : index
    %5 = memref.load %arg2[%c5] : memref<98xf32, #tpu.memory_space<smem>>
    %c6 = arith.constant 6 : index
    %6 = memref.load %arg2[%c6] : memref<98xf32, #tpu.memory_space<smem>>
    %c7 = arith.constant 7 : index
    %7 = memref.load %arg2[%c7] : memref<98xf32, #tpu.memory_space<smem>>
    %c8 = arith.constant 8 : index
    %8 = memref.load %arg2[%c8] : memref<98xf32, #tpu.memory_space<smem>>
    %c9 = arith.constant 9 : index
    %9 = memref.load %arg2[%c9] : memref<98xf32, #tpu.memory_space<smem>>
    %c10 = arith.constant 10 : index
    %10 = memref.load %arg2[%c10] : memref<98xf32, #tpu.memory_space<smem>>
    %c11 = arith.constant 11 : index
    %11 = memref.load %arg2[%c11] : memref<98xf32, #tpu.memory_space<smem>>
    %c12 = arith.constant 12 : index
    %12 = memref.load %arg2[%c12] : memref<98xf32, #tpu.memory_space<smem>>
    %c13 = arith.constant 13 : index
    %13 = memref.load %arg2[%c13] : memref<98xf32, #tpu.memory_space<smem>>
    %c14 = arith.constant 14 : index
    %14 = memref.load %arg2[%c14] : memref<98xf32, #tpu.memory_space<smem>>
    %c15 = arith.constant 15 : index
    %15 = memref.load %arg2[%c15] : memref<98xf32, #tpu.memory_space<smem>>
    %c16 = arith.constant 16 : index
    %16 = memref.load %arg2[%c16] : memref<98xf32, #tpu.memory_space<smem>>
    %c17 = arith.constant 17 : index
    %17 = memref.load %arg2[%c17] : memref<98xf32, #tpu.memory_space<smem>>
    %c18 = arith.constant 18 : index
    %18 = memref.load %arg2[%c18] : memref<98xf32, #tpu.memory_space<smem>>
    %c19 = arith.constant 19 : index
    %19 = memref.load %arg2[%c19] : memref<98xf32, #tpu.memory_space<smem>>
    %c20 = arith.constant 20 : index
    %20 = memref.load %arg2[%c20] : memref<98xf32, #tpu.memory_space<smem>>
    %c21 = arith.constant 21 : index
    %21 = memref.load %arg2[%c21] : memref<98xf32, #tpu.memory_space<smem>>
    %c22 = arith.constant 22 : index
    %22 = memref.load %arg2[%c22] : memref<98xf32, #tpu.memory_space<smem>>
    %c23 = arith.constant 23 : index
    %23 = memref.load %arg2[%c23] : memref<98xf32, #tpu.memory_space<smem>>
    %c24 = arith.constant 24 : index
    %24 = memref.load %arg2[%c24] : memref<98xf32, #tpu.memory_space<smem>>
    %c25 = arith.constant 25 : index
    %25 = memref.load %arg2[%c25] : memref<98xf32, #tpu.memory_space<smem>>
    %c26 = arith.constant 26 : index
    %26 = memref.load %arg2[%c26] : memref<98xf32, #tpu.memory_space<smem>>
    %c27 = arith.constant 27 : index
    %27 = memref.load %arg2[%c27] : memref<98xf32, #tpu.memory_space<smem>>
    %c28 = arith.constant 28 : index
    %28 = memref.load %arg2[%c28] : memref<98xf32, #tpu.memory_space<smem>>
    %c29 = arith.constant 29 : index
    %29 = memref.load %arg2[%c29] : memref<98xf32, #tpu.memory_space<smem>>
    %c30 = arith.constant 30 : index
    %30 = memref.load %arg2[%c30] : memref<98xf32, #tpu.memory_space<smem>>
    %c31 = arith.constant 31 : index
    %31 = memref.load %arg2[%c31] : memref<98xf32, #tpu.memory_space<smem>>
    %c32 = arith.constant 32 : index
    %32 = memref.load %arg2[%c32] : memref<98xf32, #tpu.memory_space<smem>>
    %c33 = arith.constant 33 : index
    %33 = memref.load %arg2[%c33] : memref<98xf32, #tpu.memory_space<smem>>
    %c34 = arith.constant 34 : index
    %34 = memref.load %arg2[%c34] : memref<98xf32, #tpu.memory_space<smem>>
    %c35 = arith.constant 35 : index
    %35 = memref.load %arg2[%c35] : memref<98xf32, #tpu.memory_space<smem>>
    %c36 = arith.constant 36 : index
    %36 = memref.load %arg2[%c36] : memref<98xf32, #tpu.memory_space<smem>>
    %c37 = arith.constant 37 : index
    %37 = memref.load %arg2[%c37] : memref<98xf32, #tpu.memory_space<smem>>
    %c38 = arith.constant 38 : index
    %38 = memref.load %arg2[%c38] : memref<98xf32, #tpu.memory_space<smem>>
    %c39 = arith.constant 39 : index
    %39 = memref.load %arg2[%c39] : memref<98xf32, #tpu.memory_space<smem>>
    %c40 = arith.constant 40 : index
    %40 = memref.load %arg2[%c40] : memref<98xf32, #tpu.memory_space<smem>>
    %c41 = arith.constant 41 : index
    %41 = memref.load %arg2[%c41] : memref<98xf32, #tpu.memory_space<smem>>
    %c42 = arith.constant 42 : index
    %42 = memref.load %arg2[%c42] : memref<98xf32, #tpu.memory_space<smem>>
    %c43 = arith.constant 43 : index
    %43 = memref.load %arg2[%c43] : memref<98xf32, #tpu.memory_space<smem>>
    %c44 = arith.constant 44 : index
    %44 = memref.load %arg2[%c44] : memref<98xf32, #tpu.memory_space<smem>>
    %c45 = arith.constant 45 : index
    %45 = memref.load %arg2[%c45] : memref<98xf32, #tpu.memory_space<smem>>
    %c46 = arith.constant 46 : index
    %46 = memref.load %arg2[%c46] : memref<98xf32, #tpu.memory_space<smem>>
    %c47 = arith.constant 47 : index
    %47 = memref.load %arg2[%c47] : memref<98xf32, #tpu.memory_space<smem>>
    %c48 = arith.constant 48 : index
    %48 = memref.load %arg2[%c48] : memref<98xf32, #tpu.memory_space<smem>>
    %c49 = arith.constant 49 : index
    %49 = memref.load %arg2[%c49] : memref<98xf32, #tpu.memory_space<smem>>
    %c50 = arith.constant 50 : index
    %50 = memref.load %arg2[%c50] : memref<98xf32, #tpu.memory_space<smem>>
    %c51 = arith.constant 51 : index
    %51 = memref.load %arg2[%c51] : memref<98xf32, #tpu.memory_space<smem>>
    %c52 = arith.constant 52 : index
    %52 = memref.load %arg2[%c52] : memref<98xf32, #tpu.memory_space<smem>>
    %c53 = arith.constant 53 : index
    %53 = memref.load %arg2[%c53] : memref<98xf32, #tpu.memory_space<smem>>
    %c54 = arith.constant 54 : index
    %54 = memref.load %arg2[%c54] : memref<98xf32, #tpu.memory_space<smem>>
    %c55 = arith.constant 55 : index
    %55 = memref.load %arg2[%c55] : memref<98xf32, #tpu.memory_space<smem>>
    %c56 = arith.constant 56 : index
    %56 = memref.load %arg2[%c56] : memref<98xf32, #tpu.memory_space<smem>>
    %c57 = arith.constant 57 : index
    %57 = memref.load %arg2[%c57] : memref<98xf32, #tpu.memory_space<smem>>
    %c58 = arith.constant 58 : index
    %58 = memref.load %arg2[%c58] : memref<98xf32, #tpu.memory_space<smem>>
    %c59 = arith.constant 59 : index
    %59 = memref.load %arg2[%c59] : memref<98xf32, #tpu.memory_space<smem>>
    %c60 = arith.constant 60 : index
    %60 = memref.load %arg2[%c60] : memref<98xf32, #tpu.memory_space<smem>>
    %c61 = arith.constant 61 : index
    %61 = memref.load %arg2[%c61] : memref<98xf32, #tpu.memory_space<smem>>
    %c62 = arith.constant 62 : index
    %62 = memref.load %arg2[%c62] : memref<98xf32, #tpu.memory_space<smem>>
    %c63 = arith.constant 63 : index
    %63 = memref.load %arg2[%c63] : memref<98xf32, #tpu.memory_space<smem>>
    %c64 = arith.constant 64 : index
    %64 = memref.load %arg2[%c64] : memref<98xf32, #tpu.memory_space<smem>>
    %c65 = arith.constant 65 : index
    %65 = memref.load %arg2[%c65] : memref<98xf32, #tpu.memory_space<smem>>
    %c66 = arith.constant 66 : index
    %66 = memref.load %arg2[%c66] : memref<98xf32, #tpu.memory_space<smem>>
    %c67 = arith.constant 67 : index
    %67 = memref.load %arg2[%c67] : memref<98xf32, #tpu.memory_space<smem>>
    %c68 = arith.constant 68 : index
    %68 = memref.load %arg2[%c68] : memref<98xf32, #tpu.memory_space<smem>>
    %c69 = arith.constant 69 : index
    %69 = memref.load %arg2[%c69] : memref<98xf32, #tpu.memory_space<smem>>
    %c70 = arith.constant 70 : index
    %70 = memref.load %arg2[%c70] : memref<98xf32, #tpu.memory_space<smem>>
    %c71 = arith.constant 71 : index
    %71 = memref.load %arg2[%c71] : memref<98xf32, #tpu.memory_space<smem>>
    %c72 = arith.constant 72 : index
    %72 = memref.load %arg2[%c72] : memref<98xf32, #tpu.memory_space<smem>>
    %c73 = arith.constant 73 : index
    %73 = memref.load %arg2[%c73] : memref<98xf32, #tpu.memory_space<smem>>
    %c74 = arith.constant 74 : index
    %74 = memref.load %arg2[%c74] : memref<98xf32, #tpu.memory_space<smem>>
    %c75 = arith.constant 75 : index
    %75 = memref.load %arg2[%c75] : memref<98xf32, #tpu.memory_space<smem>>
    %c76 = arith.constant 76 : index
    %76 = memref.load %arg2[%c76] : memref<98xf32, #tpu.memory_space<smem>>
    %c77 = arith.constant 77 : index
    %77 = memref.load %arg2[%c77] : memref<98xf32, #tpu.memory_space<smem>>
    %c78 = arith.constant 78 : index
    %78 = memref.load %arg2[%c78] : memref<98xf32, #tpu.memory_space<smem>>
    %c79 = arith.constant 79 : index
    %79 = memref.load %arg2[%c79] : memref<98xf32, #tpu.memory_space<smem>>
    %c80 = arith.constant 80 : index
    %80 = memref.load %arg2[%c80] : memref<98xf32, #tpu.memory_space<smem>>
    %c81 = arith.constant 81 : index
    %81 = memref.load %arg2[%c81] : memref<98xf32, #tpu.memory_space<smem>>
    %c82 = arith.constant 82 : index
    %82 = memref.load %arg2[%c82] : memref<98xf32, #tpu.memory_space<smem>>
    %c83 = arith.constant 83 : index
    %83 = memref.load %arg2[%c83] : memref<98xf32, #tpu.memory_space<smem>>
    %c84 = arith.constant 84 : index
    %84 = memref.load %arg2[%c84] : memref<98xf32, #tpu.memory_space<smem>>
    %c85 = arith.constant 85 : index
    %85 = memref.load %arg2[%c85] : memref<98xf32, #tpu.memory_space<smem>>
    %c86 = arith.constant 86 : index
    %86 = memref.load %arg2[%c86] : memref<98xf32, #tpu.memory_space<smem>>
    %c87 = arith.constant 87 : index
    %87 = memref.load %arg2[%c87] : memref<98xf32, #tpu.memory_space<smem>>
    %c88 = arith.constant 88 : index
    %88 = memref.load %arg2[%c88] : memref<98xf32, #tpu.memory_space<smem>>
    %c89 = arith.constant 89 : index
    %89 = memref.load %arg2[%c89] : memref<98xf32, #tpu.memory_space<smem>>
    %c90 = arith.constant 90 : index
    %90 = memref.load %arg2[%c90] : memref<98xf32, #tpu.memory_space<smem>>
    %c91 = arith.constant 91 : index
    %91 = memref.load %arg2[%c91] : memref<98xf32, #tpu.memory_space<smem>>
    %c92 = arith.constant 92 : index
    %92 = memref.load %arg2[%c92] : memref<98xf32, #tpu.memory_space<smem>>
    %c93 = arith.constant 93 : index
    %93 = memref.load %arg2[%c93] : memref<98xf32, #tpu.memory_space<smem>>
    %c94 = arith.constant 94 : index
    %94 = memref.load %arg2[%c94] : memref<98xf32, #tpu.memory_space<smem>>
    %c95 = arith.constant 95 : index
    %95 = memref.load %arg2[%c95] : memref<98xf32, #tpu.memory_space<smem>>
    %c96 = arith.constant 96 : index
    %96 = memref.load %arg2[%c96] : memref<98xf32, #tpu.memory_space<smem>>
    %c97 = arith.constant 97 : index
    %97 = memref.load %arg2[%c97] : memref<98xf32, #tpu.memory_space<smem>>
    %c0_0 = arith.constant 0 : index
    %c0_1 = arith.constant 0 : index
    %c0_2 = arith.constant 0 : index
    %c0_3 = arith.constant 0 : index
    %98 = vector.load %arg1[%c0_0, %c0_1, %c0_2, %c0_3] : memref<1x4x24x128xf32, #tpu.memory_space<vmem>>, vector<1x4x24x128xf32>
    %99 = vector.shape_cast %98 : vector<1x4x24x128xf32> to vector<4x24x128xf32>
    %cst = arith.constant dense<0xFF800000> : vector<24x128xf32>
    %100 = vector.multi_reduction <maximumf>, %99, %cst [0] : vector<4x24x128xf32> to vector<24x128xf32>
    %cst_4 = arith.constant dense<0.000000e+00> : vector<24x128xf32>
    %101 = vector.multi_reduction <add>, %99, %cst_4 [0] : vector<4x24x128xf32> to vector<24x128xf32>
    %cst_5 = arith.constant 2.500000e-01 : f32
    %102 = vector.broadcast %cst_5 : f32 to vector<24x128xf32>
    %103 = arith.mulf %101, %102 : vector<24x128xf32>
    %cst_6 = arith.constant 0.000000e+00 : f32
    %104 = vector.broadcast %cst_6 : f32 to vector<24x128xf32>
    %cst_7 = arith.constant 0.000000e+00 : f32
    %105 = vector.broadcast %cst_7 : f32 to vector<24x128xf32>
    %cst_8 = arith.constant 0.000000e+00 : f32
    %106 = vector.broadcast %cst_8 : f32 to vector<24x128xf32>
    %cst_9 = arith.constant 0.000000e+00 : f32
    %107 = vector.broadcast %cst_9 : f32 to vector<24x128xf32>
    %c3_i32 = arith.constant 3 : i32
    %108 = tpu.dynamic_rotate %100 by %c3_i32 dim 0 : vector<24x128xf32>, i32 -> vector<24x128xf32>
    %c3_i32_10 = arith.constant 3 : i32
    %109 = tpu.dynamic_rotate %108 by %c3_i32_10 dim 1 : vector<24x128xf32>, i32 -> vector<24x128xf32>
    %110 = vector.broadcast %0 : f32 to vector<24x128xf32>
    %111 = arith.mulf %110, %109 : vector<24x128xf32>
    %112 = arith.addf %104, %111 : vector<24x128xf32>
    %c2_i32 = arith.constant 2 : i32
    %113 = tpu.dynamic_rotate %108 by %c2_i32 dim 1 : vector<24x128xf32>, i32 -> vector<24x128xf32>
    %114 = vector.broadcast %1 : f32 to vector<24x128xf32>
    %115 = arith.mulf %114, %113 : vector<24x128xf32>
    %116 = arith.addf %105, %115 : vector<24x128xf32>
    %c1_i32 = arith.constant 1 : i32
    %117 = tpu.dynamic_rotate %108 by %c1_i32 dim 1 : vector<24x128xf32>, i32 -> vector<24x128xf32>
    %118 = vector.broadcast %2 : f32 to vector<24x128xf32>
    %119 = arith.mulf %118, %117 : vector<24x128xf32>
    %120 = arith.addf %106, %119 : vector<24x128xf32>
    %121 = vector.broadcast %3 : f32 to vector<24x128xf32>
    %122 = arith.mulf %121, %108 : vector<24x128xf32>
    %123 = arith.addf %107, %122 : vector<24x128xf32>
    %c127_i32 = arith.constant 127 : i32
    %124 = tpu.dynamic_rotate %108 by %c127_i32 dim 1 : vector<24x128xf32>, i32 -> vector<24x128xf32>
    %125 = vector.broadcast %4 : f32 to vector<24x128xf32>
    %126 = arith.mulf %125, %124 : vector<24x128xf32>
    %127 = arith.addf %112, %126 : vector<24x128xf32>
    %c126_i32 = arith.constant 126 : i32
    %128 = tpu.dynamic_rotate %108 by %c126_i32 dim 1 : vector<24x128xf32>, i32 -> vector<24x128xf32>
    %129 = vector.broadcast %5 : f32 to vector<24x128xf32>
    %130 = arith.mulf %129, %128 : vector<24x128xf32>
    %131 = arith.addf %116, %130 : vector<24x128xf32>
    %c125_i32 = arith.constant 125 : i32
    %132 = tpu.dynamic_rotate %108 by %c125_i32 dim 1 : vector<24x128xf32>, i32 -> vector<24x128xf32>
    %133 = vector.broadcast %6 : f32 to vector<24x128xf32>
    %134 = arith.mulf %133, %132 : vector<24x128xf32>
    %135 = arith.addf %120, %134 : vector<24x128xf32>
    %c2_i32_11 = arith.constant 2 : i32
    %136 = tpu.dynamic_rotate %100 by %c2_i32_11 dim 0 : vector<24x128xf32>, i32 -> vector<24x128xf32>
    %c3_i32_12 = arith.constant 3 : i32
    %137 = tpu.dynamic_rotate %136 by %c3_i32_12 dim 1 : vector<24x128xf32>, i32 -> vector<24x128xf32>
    %138 = vector.broadcast %7 : f32 to vector<24x128xf32>
    %139 = arith.mulf %138, %137 : vector<24x128xf32>
    %140 = arith.addf %123, %139 : vector<24x128xf32>
    %c2_i32_13 = arith.constant 2 : i32
    %141 = tpu.dynamic_rotate %136 by %c2_i32_13 dim 1 : vector<24x128xf32>, i32 -> vector<24x128xf32>
    %142 = vector.broadcast %8 : f32 to vector<24x128xf32>
    %143 = arith.mulf %142, %141 : vector<24x128xf32>
    %144 = arith.addf %127, %143 : vector<24x128xf32>
    %c1_i32_14 = arith.constant 1 : i32
    %145 = tpu.dynamic_rotate %136 by %c1_i32_14 dim 1 : vector<24x128xf32>, i32 -> vector<24x128xf32>
    %146 = vector.broadcast %9 : f32 to vector<24x128xf32>
    %147 = arith.mulf %146, %145 : vector<24x128xf32>
    %148 = arith.addf %131, %147 : vector<24x128xf32>
    %149 = vector.broadcast %10 : f32 to vector<24x128xf32>
    %150 = arith.mulf %149, %136 : vector<24x128xf32>
    %151 = arith.addf %135, %150 : vector<24x128xf32>
    %c127_i32_15 = arith.constant 127 : i32
    %152 = tpu.dynamic_rotate %136 by %c127_i32_15 dim 1 : vector<24x128xf32>, i32 -> vector<24x128xf32>
    %153 = vector.broadcast %11 : f32 to vector<24x128xf32>
    %154 = arith.mulf %153, %152 : vector<24x128xf32>
    %155 = arith.addf %140, %154 : vector<24x128xf32>
    %c126_i32_16 = arith.constant 126 : i32
    %156 = tpu.dynamic_rotate %136 by %c126_i32_16 dim 1 : vector<24x128xf32>, i32 -> vector<24x128xf32>
    %157 = vector.broadcast %12 : f32 to vector<24x128xf32>
    %158 = arith.mulf %157, %156 : vector<24x128xf32>
    %159 = arith.addf %144, %158 : vector<24x128xf32>
    %c125_i32_17 = arith.constant 125 : i32
    %160 = tpu.dynamic_rotate %136 by %c125_i32_17 dim 1 : vector<24x128xf32>, i32 -> vector<24x128xf32>
    %161 = vector.broadcast %13 : f32 to vector<24x128xf32>
    %162 = arith.mulf %161, %160 : vector<24x128xf32>
    %163 = arith.addf %148, %162 : vector<24x128xf32>
    %c1_i32_18 = arith.constant 1 : i32
    %164 = tpu.dynamic_rotate %100 by %c1_i32_18 dim 0 : vector<24x128xf32>, i32 -> vector<24x128xf32>
    %c3_i32_19 = arith.constant 3 : i32
    %165 = tpu.dynamic_rotate %164 by %c3_i32_19 dim 1 : vector<24x128xf32>, i32 -> vector<24x128xf32>
    %166 = vector.broadcast %14 : f32 to vector<24x128xf32>
    %167 = arith.mulf %166, %165 : vector<24x128xf32>
    %168 = arith.addf %151, %167 : vector<24x128xf32>
    %c2_i32_20 = arith.constant 2 : i32
    %169 = tpu.dynamic_rotate %164 by %c2_i32_20 dim 1 : vector<24x128xf32>, i32 -> vector<24x128xf32>
    %170 = vector.broadcast %15 : f32 to vector<24x128xf32>
    %171 = arith.mulf %170, %169 : vector<24x128xf32>
    %172 = arith.addf %155, %171 : vector<24x128xf32>
    %c1_i32_21 = arith.constant 1 : i32
    %173 = tpu.dynamic_rotate %164 by %c1_i32_21 dim 1 : vector<24x128xf32>, i32 -> vector<24x128xf32>
    %174 = vector.broadcast %16 : f32 to vector<24x128xf32>
    %175 = arith.mulf %174, %173 : vector<24x128xf32>
    %176 = arith.addf %159, %175 : vector<24x128xf32>
    %177 = vector.broadcast %17 : f32 to vector<24x128xf32>
    %178 = arith.mulf %177, %164 : vector<24x128xf32>
    %179 = arith.addf %163, %178 : vector<24x128xf32>
    %c127_i32_22 = arith.constant 127 : i32
    %180 = tpu.dynamic_rotate %164 by %c127_i32_22 dim 1 : vector<24x128xf32>, i32 -> vector<24x128xf32>
    %181 = vector.broadcast %18 : f32 to vector<24x128xf32>
    %182 = arith.mulf %181, %180 : vector<24x128xf32>
    %183 = arith.addf %168, %182 : vector<24x128xf32>
    %c126_i32_23 = arith.constant 126 : i32
    %184 = tpu.dynamic_rotate %164 by %c126_i32_23 dim 1 : vector<24x128xf32>, i32 -> vector<24x128xf32>
    %185 = vector.broadcast %19 : f32 to vector<24x128xf32>
    %186 = arith.mulf %185, %184 : vector<24x128xf32>
    %187 = arith.addf %172, %186 : vector<24x128xf32>
    %c125_i32_24 = arith.constant 125 : i32
    %188 = tpu.dynamic_rotate %164 by %c125_i32_24 dim 1 : vector<24x128xf32>, i32 -> vector<24x128xf32>
    %189 = vector.broadcast %20 : f32 to vector<24x128xf32>
    %190 = arith.mulf %189, %188 : vector<24x128xf32>
    %191 = arith.addf %176, %190 : vector<24x128xf32>
    %c3_i32_25 = arith.constant 3 : i32
    %192 = tpu.dynamic_rotate %100 by %c3_i32_25 dim 1 : vector<24x128xf32>, i32 -> vector<24x128xf32>
    %193 = vector.broadcast %21 : f32 to vector<24x128xf32>
    %194 = arith.mulf %193, %192 : vector<24x128xf32>
    %195 = arith.addf %179, %194 : vector<24x128xf32>
    %c2_i32_26 = arith.constant 2 : i32
    %196 = tpu.dynamic_rotate %100 by %c2_i32_26 dim 1 : vector<24x128xf32>, i32 -> vector<24x128xf32>
    %197 = vector.broadcast %22 : f32 to vector<24x128xf32>
    %198 = arith.mulf %197, %196 : vector<24x128xf32>
    %199 = arith.addf %183, %198 : vector<24x128xf32>
    %c1_i32_27 = arith.constant 1 : i32
    %200 = tpu.dynamic_rotate %100 by %c1_i32_27 dim 1 : vector<24x128xf32>, i32 -> vector<24x128xf32>
    %201 = vector.broadcast %23 : f32 to vector<24x128xf32>
    %202 = arith.mulf %201, %200 : vector<24x128xf32>
    %203 = arith.addf %187, %202 : vector<24x128xf32>
    %204 = vector.broadcast %24 : f32 to vector<24x128xf32>
    %205 = arith.mulf %204, %100 : vector<24x128xf32>
    %206 = arith.addf %191, %205 : vector<24x128xf32>
    %c127_i32_28 = arith.constant 127 : i32
    %207 = tpu.dynamic_rotate %100 by %c127_i32_28 dim 1 : vector<24x128xf32>, i32 -> vector<24x128xf32>
    %208 = vector.broadcast %25 : f32 to vector<24x128xf32>
    %209 = arith.mulf %208, %207 : vector<24x128xf32>
    %210 = arith.addf %195, %209 : vector<24x128xf32>
    %c126_i32_29 = arith.constant 126 : i32
    %211 = tpu.dynamic_rotate %100 by %c126_i32_29 dim 1 : vector<24x128xf32>, i32 -> vector<24x128xf32>
    %212 = vector.broadcast %26 : f32 to vector<24x128xf32>
    %213 = arith.mulf %212, %211 : vector<24x128xf32>
    %214 = arith.addf %199, %213 : vector<24x128xf32>
    %c125_i32_30 = arith.constant 125 : i32
    %215 = tpu.dynamic_rotate %100 by %c125_i32_30 dim 1 : vector<24x128xf32>, i32 -> vector<24x128xf32>
    %216 = vector.broadcast %27 : f32 to vector<24x128xf32>
    %217 = arith.mulf %216, %215 : vector<24x128xf32>
    %218 = arith.addf %203, %217 : vector<24x128xf32>
    %c23_i32 = arith.constant 23 : i32
    %219 = tpu.dynamic_rotate %100 by %c23_i32 dim 0 : vector<24x128xf32>, i32 -> vector<24x128xf32>
    %c3_i32_31 = arith.constant 3 : i32
    %220 = tpu.dynamic_rotate %219 by %c3_i32_31 dim 1 : vector<24x128xf32>, i32 -> vector<24x128xf32>
    %221 = vector.broadcast %28 : f32 to vector<24x128xf32>
    %222 = arith.mulf %221, %220 : vector<24x128xf32>
    %223 = arith.addf %206, %222 : vector<24x128xf32>
    %c2_i32_32 = arith.constant 2 : i32
    %224 = tpu.dynamic_rotate %219 by %c2_i32_32 dim 1 : vector<24x128xf32>, i32 -> vector<24x128xf32>
    %225 = vector.broadcast %29 : f32 to vector<24x128xf32>
    %226 = arith.mulf %225, %224 : vector<24x128xf32>
    %227 = arith.addf %210, %226 : vector<24x128xf32>
    %c1_i32_33 = arith.constant 1 : i32
    %228 = tpu.dynamic_rotate %219 by %c1_i32_33 dim 1 : vector<24x128xf32>, i32 -> vector<24x128xf32>
    %229 = vector.broadcast %30 : f32 to vector<24x128xf32>
    %230 = arith.mulf %229, %228 : vector<24x128xf32>
    %231 = arith.addf %214, %230 : vector<24x128xf32>
    %232 = vector.broadcast %31 : f32 to vector<24x128xf32>
    %233 = arith.mulf %232, %219 : vector<24x128xf32>
    %234 = arith.addf %218, %233 : vector<24x128xf32>
    %c127_i32_34 = arith.constant 127 : i32
    %235 = tpu.dynamic_rotate %219 by %c127_i32_34 dim 1 : vector<24x128xf32>, i32 -> vector<24x128xf32>
    %236 = vector.broadcast %32 : f32 to vector<24x128xf32>
    %237 = arith.mulf %236, %235 : vector<24x128xf32>
    %238 = arith.addf %223, %237 : vector<24x128xf32>
    %c126_i32_35 = arith.constant 126 : i32
    %239 = tpu.dynamic_rotate %219 by %c126_i32_35 dim 1 : vector<24x128xf32>, i32 -> vector<24x128xf32>
    %240 = vector.broadcast %33 : f32 to vector<24x128xf32>
    %241 = arith.mulf %240, %239 : vector<24x128xf32>
    %242 = arith.addf %227, %241 : vector<24x128xf32>
    %c125_i32_36 = arith.constant 125 : i32
    %243 = tpu.dynamic_rotate %219 by %c125_i32_36 dim 1 : vector<24x128xf32>, i32 -> vector<24x128xf32>
    %244 = vector.broadcast %34 : f32 to vector<24x128xf32>
    %245 = arith.mulf %244, %243 : vector<24x128xf32>
    %246 = arith.addf %231, %245 : vector<24x128xf32>
    %c22_i32 = arith.constant 22 : i32
    %247 = tpu.dynamic_rotate %100 by %c22_i32 dim 0 : vector<24x128xf32>, i32 -> vector<24x128xf32>
    %c3_i32_37 = arith.constant 3 : i32
    %248 = tpu.dynamic_rotate %247 by %c3_i32_37 dim 1 : vector<24x128xf32>, i32 -> vector<24x128xf32>
    %249 = vector.broadcast %35 : f32 to vector<24x128xf32>
    %250 = arith.mulf %249, %248 : vector<24x128xf32>
    %251 = arith.addf %234, %250 : vector<24x128xf32>
    %c2_i32_38 = arith.constant 2 : i32
    %252 = tpu.dynamic_rotate %247 by %c2_i32_38 dim 1 : vector<24x128xf32>, i32 -> vector<24x128xf32>
    %253 = vector.broadcast %36 : f32 to vector<24x128xf32>
    %254 = arith.mulf %253, %252 : vector<24x128xf32>
    %255 = arith.addf %238, %254 : vector<24x128xf32>
    %c1_i32_39 = arith.constant 1 : i32
    %256 = tpu.dynamic_rotate %247 by %c1_i32_39 dim 1 : vector<24x128xf32>, i32 -> vector<24x128xf32>
    %257 = vector.broadcast %37 : f32 to vector<24x128xf32>
    %258 = arith.mulf %257, %256 : vector<24x128xf32>
    %259 = arith.addf %242, %258 : vector<24x128xf32>
    %260 = vector.broadcast %38 : f32 to vector<24x128xf32>
    %261 = arith.mulf %260, %247 : vector<24x128xf32>
    %262 = arith.addf %246, %261 : vector<24x128xf32>
    %c127_i32_40 = arith.constant 127 : i32
    %263 = tpu.dynamic_rotate %247 by %c127_i32_40 dim 1 : vector<24x128xf32>, i32 -> vector<24x128xf32>
    %264 = vector.broadcast %39 : f32 to vector<24x128xf32>
    %265 = arith.mulf %264, %263 : vector<24x128xf32>
    %266 = arith.addf %251, %265 : vector<24x128xf32>
    %c126_i32_41 = arith.constant 126 : i32
    %267 = tpu.dynamic_rotate %247 by %c126_i32_41 dim 1 : vector<24x128xf32>, i32 -> vector<24x128xf32>
    %268 = vector.broadcast %40 : f32 to vector<24x128xf32>
    %269 = arith.mulf %268, %267 : vector<24x128xf32>
    %270 = arith.addf %255, %269 : vector<24x128xf32>
    %c125_i32_42 = arith.constant 125 : i32
    %271 = tpu.dynamic_rotate %247 by %c125_i32_42 dim 1 : vector<24x128xf32>, i32 -> vector<24x128xf32>
    %272 = vector.broadcast %41 : f32 to vector<24x128xf32>
    %273 = arith.mulf %272, %271 : vector<24x128xf32>
    %274 = arith.addf %259, %273 : vector<24x128xf32>
    %c21_i32 = arith.constant 21 : i32
    %275 = tpu.dynamic_rotate %100 by %c21_i32 dim 0 : vector<24x128xf32>, i32 -> vector<24x128xf32>
    %c3_i32_43 = arith.constant 3 : i32
    %276 = tpu.dynamic_rotate %275 by %c3_i32_43 dim 1 : vector<24x128xf32>, i32 -> vector<24x128xf32>
    %277 = vector.broadcast %42 : f32 to vector<24x128xf32>
    %278 = arith.mulf %277, %276 : vector<24x128xf32>
    %279 = arith.addf %262, %278 : vector<24x128xf32>
    %c2_i32_44 = arith.constant 2 : i32
    %280 = tpu.dynamic_rotate %275 by %c2_i32_44 dim 1 : vector<24x128xf32>, i32 -> vector<24x128xf32>
    %281 = vector.broadcast %43 : f32 to vector<24x128xf32>
    %282 = arith.mulf %281, %280 : vector<24x128xf32>
    %283 = arith.addf %266, %282 : vector<24x128xf32>
    %c1_i32_45 = arith.constant 1 : i32
    %284 = tpu.dynamic_rotate %275 by %c1_i32_45 dim 1 : vector<24x128xf32>, i32 -> vector<24x128xf32>
    %285 = vector.broadcast %44 : f32 to vector<24x128xf32>
    %286 = arith.mulf %285, %284 : vector<24x128xf32>
    %287 = arith.addf %270, %286 : vector<24x128xf32>
    %288 = vector.broadcast %45 : f32 to vector<24x128xf32>
    %289 = arith.mulf %288, %275 : vector<24x128xf32>
    %290 = arith.addf %274, %289 : vector<24x128xf32>
    %c127_i32_46 = arith.constant 127 : i32
    %291 = tpu.dynamic_rotate %275 by %c127_i32_46 dim 1 : vector<24x128xf32>, i32 -> vector<24x128xf32>
    %292 = vector.broadcast %46 : f32 to vector<24x128xf32>
    %293 = arith.mulf %292, %291 : vector<24x128xf32>
    %294 = arith.addf %279, %293 : vector<24x128xf32>
    %c126_i32_47 = arith.constant 126 : i32
    %295 = tpu.dynamic_rotate %275 by %c126_i32_47 dim 1 : vector<24x128xf32>, i32 -> vector<24x128xf32>
    %296 = vector.broadcast %47 : f32 to vector<24x128xf32>
    %297 = arith.mulf %296, %295 : vector<24x128xf32>
    %298 = arith.addf %283, %297 : vector<24x128xf32>
    %c125_i32_48 = arith.constant 125 : i32
    %299 = tpu.dynamic_rotate %275 by %c125_i32_48 dim 1 : vector<24x128xf32>, i32 -> vector<24x128xf32>
    %300 = vector.broadcast %48 : f32 to vector<24x128xf32>
    %301 = arith.mulf %300, %299 : vector<24x128xf32>
    %302 = arith.addf %287, %301 : vector<24x128xf32>
    %c3_i32_49 = arith.constant 3 : i32
    %303 = tpu.dynamic_rotate %103 by %c3_i32_49 dim 0 : vector<24x128xf32>, i32 -> vector<24x128xf32>
    %c3_i32_50 = arith.constant 3 : i32
    %304 = tpu.dynamic_rotate %303 by %c3_i32_50 dim 1 : vector<24x128xf32>, i32 -> vector<24x128xf32>
    %305 = vector.broadcast %49 : f32 to vector<24x128xf32>
    %306 = arith.mulf %305, %304 : vector<24x128xf32>
    %307 = arith.addf %290, %306 : vector<24x128xf32>
    %c2_i32_51 = arith.constant 2 : i32
    %308 = tpu.dynamic_rotate %303 by %c2_i32_51 dim 1 : vector<24x128xf32>, i32 -> vector<24x128xf32>
    %309 = vector.broadcast %50 : f32 to vector<24x128xf32>
    %310 = arith.mulf %309, %308 : vector<24x128xf32>
    %311 = arith.addf %294, %310 : vector<24x128xf32>
    %c1_i32_52 = arith.constant 1 : i32
    %312 = tpu.dynamic_rotate %303 by %c1_i32_52 dim 1 : vector<24x128xf32>, i32 -> vector<24x128xf32>
    %313 = vector.broadcast %51 : f32 to vector<24x128xf32>
    %314 = arith.mulf %313, %312 : vector<24x128xf32>
    %315 = arith.addf %298, %314 : vector<24x128xf32>
    %316 = vector.broadcast %52 : f32 to vector<24x128xf32>
    %317 = arith.mulf %316, %303 : vector<24x128xf32>
    %318 = arith.addf %302, %317 : vector<24x128xf32>
    %c127_i32_53 = arith.constant 127 : i32
    %319 = tpu.dynamic_rotate %303 by %c127_i32_53 dim 1 : vector<24x128xf32>, i32 -> vector<24x128xf32>
    %320 = vector.broadcast %53 : f32 to vector<24x128xf32>
    %321 = arith.mulf %320, %319 : vector<24x128xf32>
    %322 = arith.addf %307, %321 : vector<24x128xf32>
    %c126_i32_54 = arith.constant 126 : i32
    %323 = tpu.dynamic_rotate %303 by %c126_i32_54 dim 1 : vector<24x128xf32>, i32 -> vector<24x128xf32>
    %324 = vector.broadcast %54 : f32 to vector<24x128xf32>
    %325 = arith.mulf %324, %323 : vector<24x128xf32>
    %326 = arith.addf %311, %325 : vector<24x128xf32>
    %c125_i32_55 = arith.constant 125 : i32
    %327 = tpu.dynamic_rotate %303 by %c125_i32_55 dim 1 : vector<24x128xf32>, i32 -> vector<24x128xf32>
    %328 = vector.broadcast %55 : f32 to vector<24x128xf32>
    %329 = arith.mulf %328, %327 : vector<24x128xf32>
    %330 = arith.addf %315, %329 : vector<24x128xf32>
    %c2_i32_56 = arith.constant 2 : i32
    %331 = tpu.dynamic_rotate %103 by %c2_i32_56 dim 0 : vector<24x128xf32>, i32 -> vector<24x128xf32>
    %c3_i32_57 = arith.constant 3 : i32
    %332 = tpu.dynamic_rotate %331 by %c3_i32_57 dim 1 : vector<24x128xf32>, i32 -> vector<24x128xf32>
    %333 = vector.broadcast %56 : f32 to vector<24x128xf32>
    %334 = arith.mulf %333, %332 : vector<24x128xf32>
    %335 = arith.addf %318, %334 : vector<24x128xf32>
    %c2_i32_58 = arith.constant 2 : i32
    %336 = tpu.dynamic_rotate %331 by %c2_i32_58 dim 1 : vector<24x128xf32>, i32 -> vector<24x128xf32>
    %337 = vector.broadcast %57 : f32 to vector<24x128xf32>
    %338 = arith.mulf %337, %336 : vector<24x128xf32>
    %339 = arith.addf %322, %338 : vector<24x128xf32>
    %c1_i32_59 = arith.constant 1 : i32
    %340 = tpu.dynamic_rotate %331 by %c1_i32_59 dim 1 : vector<24x128xf32>, i32 -> vector<24x128xf32>
    %341 = vector.broadcast %58 : f32 to vector<24x128xf32>
    %342 = arith.mulf %341, %340 : vector<24x128xf32>
    %343 = arith.addf %326, %342 : vector<24x128xf32>
    %344 = vector.broadcast %59 : f32 to vector<24x128xf32>
    %345 = arith.mulf %344, %331 : vector<24x128xf32>
    %346 = arith.addf %330, %345 : vector<24x128xf32>
    %c127_i32_60 = arith.constant 127 : i32
    %347 = tpu.dynamic_rotate %331 by %c127_i32_60 dim 1 : vector<24x128xf32>, i32 -> vector<24x128xf32>
    %348 = vector.broadcast %60 : f32 to vector<24x128xf32>
    %349 = arith.mulf %348, %347 : vector<24x128xf32>
    %350 = arith.addf %335, %349 : vector<24x128xf32>
    %c126_i32_61 = arith.constant 126 : i32
    %351 = tpu.dynamic_rotate %331 by %c126_i32_61 dim 1 : vector<24x128xf32>, i32 -> vector<24x128xf32>
    %352 = vector.broadcast %61 : f32 to vector<24x128xf32>
    %353 = arith.mulf %352, %351 : vector<24x128xf32>
    %354 = arith.addf %339, %353 : vector<24x128xf32>
    %c125_i32_62 = arith.constant 125 : i32
    %355 = tpu.dynamic_rotate %331 by %c125_i32_62 dim 1 : vector<24x128xf32>, i32 -> vector<24x128xf32>
    %356 = vector.broadcast %62 : f32 to vector<24x128xf32>
    %357 = arith.mulf %356, %355 : vector<24x128xf32>
    %358 = arith.addf %343, %357 : vector<24x128xf32>
    %c1_i32_63 = arith.constant 1 : i32
    %359 = tpu.dynamic_rotate %103 by %c1_i32_63 dim 0 : vector<24x128xf32>, i32 -> vector<24x128xf32>
    %c3_i32_64 = arith.constant 3 : i32
    %360 = tpu.dynamic_rotate %359 by %c3_i32_64 dim 1 : vector<24x128xf32>, i32 -> vector<24x128xf32>
    %361 = vector.broadcast %63 : f32 to vector<24x128xf32>
    %362 = arith.mulf %361, %360 : vector<24x128xf32>
    %363 = arith.addf %346, %362 : vector<24x128xf32>
    %c2_i32_65 = arith.constant 2 : i32
    %364 = tpu.dynamic_rotate %359 by %c2_i32_65 dim 1 : vector<24x128xf32>, i32 -> vector<24x128xf32>
    %365 = vector.broadcast %64 : f32 to vector<24x128xf32>
    %366 = arith.mulf %365, %364 : vector<24x128xf32>
    %367 = arith.addf %350, %366 : vector<24x128xf32>
    %c1_i32_66 = arith.constant 1 : i32
    %368 = tpu.dynamic_rotate %359 by %c1_i32_66 dim 1 : vector<24x128xf32>, i32 -> vector<24x128xf32>
    %369 = vector.broadcast %65 : f32 to vector<24x128xf32>
    %370 = arith.mulf %369, %368 : vector<24x128xf32>
    %371 = arith.addf %354, %370 : vector<24x128xf32>
    %372 = vector.broadcast %66 : f32 to vector<24x128xf32>
    %373 = arith.mulf %372, %359 : vector<24x128xf32>
    %374 = arith.addf %358, %373 : vector<24x128xf32>
    %c127_i32_67 = arith.constant 127 : i32
    %375 = tpu.dynamic_rotate %359 by %c127_i32_67 dim 1 : vector<24x128xf32>, i32 -> vector<24x128xf32>
    %376 = vector.broadcast %67 : f32 to vector<24x128xf32>
    %377 = arith.mulf %376, %375 : vector<24x128xf32>
    %378 = arith.addf %363, %377 : vector<24x128xf32>
    %c126_i32_68 = arith.constant 126 : i32
    %379 = tpu.dynamic_rotate %359 by %c126_i32_68 dim 1 : vector<24x128xf32>, i32 -> vector<24x128xf32>
    %380 = vector.broadcast %68 : f32 to vector<24x128xf32>
    %381 = arith.mulf %380, %379 : vector<24x128xf32>
    %382 = arith.addf %367, %381 : vector<24x128xf32>
    %c125_i32_69 = arith.constant 125 : i32
    %383 = tpu.dynamic_rotate %359 by %c125_i32_69 dim 1 : vector<24x128xf32>, i32 -> vector<24x128xf32>
    %384 = vector.broadcast %69 : f32 to vector<24x128xf32>
    %385 = arith.mulf %384, %383 : vector<24x128xf32>
    %386 = arith.addf %371, %385 : vector<24x128xf32>
    %c3_i32_70 = arith.constant 3 : i32
    %387 = tpu.dynamic_rotate %103 by %c3_i32_70 dim 1 : vector<24x128xf32>, i32 -> vector<24x128xf32>
    %388 = vector.broadcast %70 : f32 to vector<24x128xf32>
    %389 = arith.mulf %388, %387 : vector<24x128xf32>
    %390 = arith.addf %374, %389 : vector<24x128xf32>
    %c2_i32_71 = arith.constant 2 : i32
    %391 = tpu.dynamic_rotate %103 by %c2_i32_71 dim 1 : vector<24x128xf32>, i32 -> vector<24x128xf32>
    %392 = vector.broadcast %71 : f32 to vector<24x128xf32>
    %393 = arith.mulf %392, %391 : vector<24x128xf32>
    %394 = arith.addf %378, %393 : vector<24x128xf32>
    %c1_i32_72 = arith.constant 1 : i32
    %395 = tpu.dynamic_rotate %103 by %c1_i32_72 dim 1 : vector<24x128xf32>, i32 -> vector<24x128xf32>
    %396 = vector.broadcast %72 : f32 to vector<24x128xf32>
    %397 = arith.mulf %396, %395 : vector<24x128xf32>
    %398 = arith.addf %382, %397 : vector<24x128xf32>
    %399 = vector.broadcast %73 : f32 to vector<24x128xf32>
    %400 = arith.mulf %399, %103 : vector<24x128xf32>
    %401 = arith.addf %386, %400 : vector<24x128xf32>
    %c127_i32_73 = arith.constant 127 : i32
    %402 = tpu.dynamic_rotate %103 by %c127_i32_73 dim 1 : vector<24x128xf32>, i32 -> vector<24x128xf32>
    %403 = vector.broadcast %74 : f32 to vector<24x128xf32>
    %404 = arith.mulf %403, %402 : vector<24x128xf32>
    %405 = arith.addf %390, %404 : vector<24x128xf32>
    %c126_i32_74 = arith.constant 126 : i32
    %406 = tpu.dynamic_rotate %103 by %c126_i32_74 dim 1 : vector<24x128xf32>, i32 -> vector<24x128xf32>
    %407 = vector.broadcast %75 : f32 to vector<24x128xf32>
    %408 = arith.mulf %407, %406 : vector<24x128xf32>
    %409 = arith.addf %394, %408 : vector<24x128xf32>
    %c125_i32_75 = arith.constant 125 : i32
    %410 = tpu.dynamic_rotate %103 by %c125_i32_75 dim 1 : vector<24x128xf32>, i32 -> vector<24x128xf32>
    %411 = vector.broadcast %76 : f32 to vector<24x128xf32>
    %412 = arith.mulf %411, %410 : vector<24x128xf32>
    %413 = arith.addf %398, %412 : vector<24x128xf32>
    %c23_i32_76 = arith.constant 23 : i32
    %414 = tpu.dynamic_rotate %103 by %c23_i32_76 dim 0 : vector<24x128xf32>, i32 -> vector<24x128xf32>
    %c3_i32_77 = arith.constant 3 : i32
    %415 = tpu.dynamic_rotate %414 by %c3_i32_77 dim 1 : vector<24x128xf32>, i32 -> vector<24x128xf32>
    %416 = vector.broadcast %77 : f32 to vector<24x128xf32>
    %417 = arith.mulf %416, %415 : vector<24x128xf32>
    %418 = arith.addf %401, %417 : vector<24x128xf32>
    %c2_i32_78 = arith.constant 2 : i32
    %419 = tpu.dynamic_rotate %414 by %c2_i32_78 dim 1 : vector<24x128xf32>, i32 -> vector<24x128xf32>
    %420 = vector.broadcast %78 : f32 to vector<24x128xf32>
    %421 = arith.mulf %420, %419 : vector<24x128xf32>
    %422 = arith.addf %405, %421 : vector<24x128xf32>
    %c1_i32_79 = arith.constant 1 : i32
    %423 = tpu.dynamic_rotate %414 by %c1_i32_79 dim 1 : vector<24x128xf32>, i32 -> vector<24x128xf32>
    %424 = vector.broadcast %79 : f32 to vector<24x128xf32>
    %425 = arith.mulf %424, %423 : vector<24x128xf32>
    %426 = arith.addf %409, %425 : vector<24x128xf32>
    %427 = vector.broadcast %80 : f32 to vector<24x128xf32>
    %428 = arith.mulf %427, %414 : vector<24x128xf32>
    %429 = arith.addf %413, %428 : vector<24x128xf32>
    %c127_i32_80 = arith.constant 127 : i32
    %430 = tpu.dynamic_rotate %414 by %c127_i32_80 dim 1 : vector<24x128xf32>, i32 -> vector<24x128xf32>
    %431 = vector.broadcast %81 : f32 to vector<24x128xf32>
    %432 = arith.mulf %431, %430 : vector<24x128xf32>
    %433 = arith.addf %418, %432 : vector<24x128xf32>
    %c126_i32_81 = arith.constant 126 : i32
    %434 = tpu.dynamic_rotate %414 by %c126_i32_81 dim 1 : vector<24x128xf32>, i32 -> vector<24x128xf32>
    %435 = vector.broadcast %82 : f32 to vector<24x128xf32>
    %436 = arith.mulf %435, %434 : vector<24x128xf32>
    %437 = arith.addf %422, %436 : vector<24x128xf32>
    %c125_i32_82 = arith.constant 125 : i32
    %438 = tpu.dynamic_rotate %414 by %c125_i32_82 dim 1 : vector<24x128xf32>, i32 -> vector<24x128xf32>
    %439 = vector.broadcast %83 : f32 to vector<24x128xf32>
    %440 = arith.mulf %439, %438 : vector<24x128xf32>
    %441 = arith.addf %426, %440 : vector<24x128xf32>
    %c22_i32_83 = arith.constant 22 : i32
    %442 = tpu.dynamic_rotate %103 by %c22_i32_83 dim 0 : vector<24x128xf32>, i32 -> vector<24x128xf32>
    %c3_i32_84 = arith.constant 3 : i32
    %443 = tpu.dynamic_rotate %442 by %c3_i32_84 dim 1 : vector<24x128xf32>, i32 -> vector<24x128xf32>
    %444 = vector.broadcast %84 : f32 to vector<24x128xf32>
    %445 = arith.mulf %444, %443 : vector<24x128xf32>
    %446 = arith.addf %429, %445 : vector<24x128xf32>
    %c2_i32_85 = arith.constant 2 : i32
    %447 = tpu.dynamic_rotate %442 by %c2_i32_85 dim 1 : vector<24x128xf32>, i32 -> vector<24x128xf32>
    %448 = vector.broadcast %85 : f32 to vector<24x128xf32>
    %449 = arith.mulf %448, %447 : vector<24x128xf32>
    %450 = arith.addf %433, %449 : vector<24x128xf32>
    %c1_i32_86 = arith.constant 1 : i32
    %451 = tpu.dynamic_rotate %442 by %c1_i32_86 dim 1 : vector<24x128xf32>, i32 -> vector<24x128xf32>
    %452 = vector.broadcast %86 : f32 to vector<24x128xf32>
    %453 = arith.mulf %452, %451 : vector<24x128xf32>
    %454 = arith.addf %437, %453 : vector<24x128xf32>
    %455 = vector.broadcast %87 : f32 to vector<24x128xf32>
    %456 = arith.mulf %455, %442 : vector<24x128xf32>
    %457 = arith.addf %441, %456 : vector<24x128xf32>
    %c127_i32_87 = arith.constant 127 : i32
    %458 = tpu.dynamic_rotate %442 by %c127_i32_87 dim 1 : vector<24x128xf32>, i32 -> vector<24x128xf32>
    %459 = vector.broadcast %88 : f32 to vector<24x128xf32>
    %460 = arith.mulf %459, %458 : vector<24x128xf32>
    %461 = arith.addf %446, %460 : vector<24x128xf32>
    %c126_i32_88 = arith.constant 126 : i32
    %462 = tpu.dynamic_rotate %442 by %c126_i32_88 dim 1 : vector<24x128xf32>, i32 -> vector<24x128xf32>
    %463 = vector.broadcast %89 : f32 to vector<24x128xf32>
    %464 = arith.mulf %463, %462 : vector<24x128xf32>
    %465 = arith.addf %450, %464 : vector<24x128xf32>
    %c125_i32_89 = arith.constant 125 : i32
    %466 = tpu.dynamic_rotate %442 by %c125_i32_89 dim 1 : vector<24x128xf32>, i32 -> vector<24x128xf32>
    %467 = vector.broadcast %90 : f32 to vector<24x128xf32>
    %468 = arith.mulf %467, %466 : vector<24x128xf32>
    %469 = arith.addf %454, %468 : vector<24x128xf32>
    %c21_i32_90 = arith.constant 21 : i32
    %470 = tpu.dynamic_rotate %103 by %c21_i32_90 dim 0 : vector<24x128xf32>, i32 -> vector<24x128xf32>
    %c3_i32_91 = arith.constant 3 : i32
    %471 = tpu.dynamic_rotate %470 by %c3_i32_91 dim 1 : vector<24x128xf32>, i32 -> vector<24x128xf32>
    %472 = vector.broadcast %91 : f32 to vector<24x128xf32>
    %473 = arith.mulf %472, %471 : vector<24x128xf32>
    %474 = arith.addf %457, %473 : vector<24x128xf32>
    %c2_i32_92 = arith.constant 2 : i32
    %475 = tpu.dynamic_rotate %470 by %c2_i32_92 dim 1 : vector<24x128xf32>, i32 -> vector<24x128xf32>
    %476 = vector.broadcast %92 : f32 to vector<24x128xf32>
    %477 = arith.mulf %476, %475 : vector<24x128xf32>
    %478 = arith.addf %461, %477 : vector<24x128xf32>
    %c1_i32_93 = arith.constant 1 : i32
    %479 = tpu.dynamic_rotate %470 by %c1_i32_93 dim 1 : vector<24x128xf32>, i32 -> vector<24x128xf32>
    %480 = vector.broadcast %93 : f32 to vector<24x128xf32>
    %481 = arith.mulf %480, %479 : vector<24x128xf32>
    %482 = arith.addf %465, %481 : vector<24x128xf32>
    %483 = vector.broadcast %94 : f32 to vector<24x128xf32>
    %484 = arith.mulf %483, %470 : vector<24x128xf32>
    %485 = arith.addf %469, %484 : vector<24x128xf32>
    %c127_i32_94 = arith.constant 127 : i32
    %486 = tpu.dynamic_rotate %470 by %c127_i32_94 dim 1 : vector<24x128xf32>, i32 -> vector<24x128xf32>
    %487 = vector.broadcast %95 : f32 to vector<24x128xf32>
    %488 = arith.mulf %487, %486 : vector<24x128xf32>
    %489 = arith.addf %474, %488 : vector<24x128xf32>
    %c126_i32_95 = arith.constant 126 : i32
    %490 = tpu.dynamic_rotate %470 by %c126_i32_95 dim 1 : vector<24x128xf32>, i32 -> vector<24x128xf32>
    %491 = vector.broadcast %96 : f32 to vector<24x128xf32>
    %492 = arith.mulf %491, %490 : vector<24x128xf32>
    %493 = arith.addf %478, %492 : vector<24x128xf32>
    %c125_i32_96 = arith.constant 125 : i32
    %494 = tpu.dynamic_rotate %470 by %c125_i32_96 dim 1 : vector<24x128xf32>, i32 -> vector<24x128xf32>
    %495 = vector.broadcast %97 : f32 to vector<24x128xf32>
    %496 = arith.mulf %495, %494 : vector<24x128xf32>
    %497 = arith.addf %482, %496 : vector<24x128xf32>
    %498 = arith.addf %493, %497 : vector<24x128xf32>
    %499 = arith.addf %485, %489 : vector<24x128xf32>
    %500 = arith.addf %498, %499 : vector<24x128xf32>
    %501 = arith.negf %500 : vector<24x128xf32>
    %502 = math.exp %501 : vector<24x128xf32>
    %cst_97 = arith.constant 1.000000e+00 : f32
    %503 = vector.broadcast %cst_97 : f32 to vector<24x128xf32>
    %504 = arith.addf %503, %502 : vector<24x128xf32>
    %505 = arith.divf %503, %504 : vector<24x128xf32>
    %c0_98 = arith.constant 0 : index
    %c0_99 = arith.constant 0 : index
    %c0_100 = arith.constant 0 : index
    %c0_101 = arith.constant 0 : index
    %506 = vector.load %arg3[%c0_98, %c0_99, %c0_100, %c0_101] : memref<1x1x24x128xf32, #tpu.memory_space<vmem>>, vector<1x1x24x128xf32>
    %507 = vector.shape_cast %506 : vector<1x1x24x128xf32> to vector<24x128xf32>
    %508 = vector.shape_cast %505 : vector<24x128xf32> to vector<1x1x24x128xf32>
    tpu.vector_store %arg3[%c0_98, %c0_99, %c0_100, %c0_101], %508 {strides = array<i32>} : memref<1x1x24x128xf32, #tpu.memory_space<vmem>>, vector<1x1x24x128xf32>,
    return
  }
  func.func @transform_0(%arg0: i32) -> (i32, i32, i32, i32) {
    %c0_i32 = arith.constant 0 : i32
    %c0_i32_0 = arith.constant 0 : i32
    %c0_i32_1 = arith.constant 0 : i32
    %c0_i32_2 = arith.constant 0 : i32
    return %arg0, %c0_i32, %c0_i32_0, %c0_i32_1 : i32, i32, i32, i32
  }
  func.func @transform_1(%arg0: i32) -> i32 {
    %c0_i32 = arith.constant 0 : i32
    %c0_i32_0 = arith.constant 0 : i32
    return %c0_i32 : i32
  }
  func.func @transform_2(%arg0: i32) -> (i32, i32, i32, i32) {
    %c0_i32 = arith.constant 0 : i32
    %c0_i32_0 = arith.constant 0 : i32
    %c0_i32_1 = arith.constant 0 : i32
    %c0_i32_2 = arith.constant 0 : i32
    return %arg0, %c0_i32, %c0_i32_0, %c0_i32_1 : i32, i32, i32, i32
  }
}

</mosaic_0001>

<llo_original>
// kernel: tpu_custom_call.1
$region0: #{tpu_custom_call.1}
  #allocation0 [shape = 'u32[]', space=smem, size = 0x4, offset = 0x4, fixed_abs, tag = 'smem constant byte address 0x4 - core index']
  #allocation1 [shape = 'u32[72,128]{1,0:T(1,128)}', space=vmem, size = 0x9000, scoped, tag = 'internal scratch']
  %s0 = inlined_call_operand.hbm [shape: f32[2,4,24,128], index: 0, kind: input, shape index: {}]
  %s1 = inlined_call_operand.hbm [shape: f32[98], index: 1, kind: input, shape index: {}]
  %s2 = inlined_call_operand.hbm [shape: f32[2,1,24,128], index: 2, kind: output, shape index: {}]
  %s3 = sld [smem:[#allocation0]]
  $region49: #{tpu_custom_call.1} parent=0
    _
  %s5 = ssub.s32 1, %s3
  %s6 = scalar_select 0, %s5, %s3
  $region1: #{tpu_custom_call.1} parent=0
    #allocation2 [shape = 'u8[98304]{0}', space=vmem, size = 0x18000, scoped, tag = 'input window, operand 0']
    #allocation3 [shape = 's32[2]{0}', space=sflag, size = 0x8, scoped, tag = 'scoped memory for tpu_custom_call.1']
    #allocation4 [shape = 's32[2]{0}', space=sflag, size = 0x8, scoped, tag = 'scoped memory for tpu_custom_call.1']
    #allocation5 [shape = 's32[2]{0}', space=sflag, size = 0x8, scoped, tag = 'scoped memory for tpu_custom_call.1']
    #allocation6 [shape = 'u8[512]{0}', space=smem, size = 0x200, scoped, tag = 'input window, operand 1, single buffered']
    #allocation7 [shape = 'u8[24576]{0}', space=vmem, size = 0x6000, scoped, tag = 'output window, operand 0']
    %7 = vsyncpa [#allocation3], 0
    %s8 = scalar_lea.sflag [#allocation3], 1
    %9 = vsyncpa %s8, 0
    %10 = vsyncpa [#allocation5], 0
    %11 = vsyncpa [#allocation4], 0
    %s12 = scalar_lea.sflag [#allocation4], 1
    %13 = vsyncpa %s12, 0
    loop: start=0, step=1, limit=4
    $region2: #{tpu_custom_call.1} parent=1 // loop_pre_header
      _
    $region3: #{tpu_custom_call.1} parent=1 // loop_header
      %s15 = sphi 0, %s19
      %p16 = scmp.ge.s32.totalorder %s15, 4
      %s25 = sphi 0, %s27
      %s28 = sphi 0, %s25
      %s29 = sphi 0, %s28
      %s45 = sphi 0, %s29
      %s49 = sphi 0, %s49
      %s51 = sphi 0, %s49
      %s52 = sphi 0, %s51
      %s66 = sphi 0, %s52
      %s72 = sphi 0, %s74
      %s75 = sphi 0, %s72
      %s76 = sphi 0, %s75
      %s92 = sphi 0, %s76
    $region4: #{tpu_custom_call.1} parent=1 // loop_header_branch
      %18 = sbr.rel (%p16) target = $region8
    $region5: #{tpu_custom_call.1} parent=1 // loop_body
      %s20 = ssub.s32 %s15, 1
      %s21 = ssub.s32 %s15, 2
      %s22 = sadd.s32 %s15, 1
      %s23 = ssub.s32 %s15, %s22
      %p24 = scmp.eq.s32.totalorder %s23, 0
      %s26 = sadd.s32 %s25, 1
      %s27 = scalar_select %p24, %s25, %s26
      %p30 = pneg %p24
      %p31 = scmp.eq.s32.totalorder %s15, 1
      %p32 = por %p30, %p31
      %p33 = scmp.ne.s32.totalorder %s25, %s28
      %p34 = scmp.eq.s32.totalorder %s15, 0
      %p35 = por %p33, %p34
      %p36 = scmp.ne.s32.totalorder %s25, %s28
      %p37 = scmp.eq.s32.totalorder %s20, 1
      %p38 = por %p36, %p37
      %p39 = scmp.ne.s32.totalorder %s28, %s29
      %p40 = scmp.eq.s32.totalorder %s20, 0
      %p41 = por %p39, %p40
      %p42 = scmp.ne.s32.totalorder %s28, %s29
      %p43 = scmp.eq.s32.totalorder %s21, 1
      %p44 = por %p42, %p43
      %p46 = scmp.ne.s32.totalorder %s29, %s45
      %p47 = scmp.eq.s32.totalorder %s21, 0
      %p48 = por %p46, %p47
      %s50 = sadd.s32 %s49, 1
      %p53 = scmp.eq.s32.totalorder %s15, 1
      %p54 = scmp.ne.s32.totalorder %s49, %s51
      %p55 = scmp.eq.s32.totalorder %s15, 0
      %p56 = por %p54, %p55
      %p57 = scmp.ne.s32.totalorder %s49, %s51
      %p58 = scmp.eq.s32.totalorder %s20, 1
      %p59 = por %p57, %p58
      %p60 = scmp.ne.s32.totalorder %s51, %s52
      %p61 = scmp.eq.s32.totalorder %s20, 0
      %p62 = por %p60, %p61
      %p63 = scmp.ne.s32.totalorder %s51, %s52
      %p64 = scmp.eq.s32.totalorder %s21, 1
      %p65 = por %p63, %p64
      %p67 = scmp.ne.s32.totalorder %s52, %s66
      %p68 = scmp.eq.s32.totalorder %s21, 0
      %p69 = por %p67, %p68
      %s70 = ssub.s32 %s15, %s22
      %p71 = scmp.eq.s32.totalorder %s70, 0
      %s73 = sadd.s32 %s72, 1
      %s74 = scalar_select %p71, %s72, %s73
      %p77 = pneg %p71
      %p78 = scmp.eq.s32.totalorder %s15, 1
      %p79 = por %p77, %p78
      %p80 = scmp.ne.s32.totalorder %s72, %s75
      %p81 = scmp.eq.s32.totalorder %s15, 0
      %p82 = por %p80, %p81
      %p83 = scmp.ne.s32.totalorder %s72, %s75
      %p84 = scmp.eq.s32.totalorder %s20, 1
      %p85 = por %p83, %p84
      %p86 = scmp.ne.s32.totalorder %s75, %s76
      %p87 = scmp.eq.s32.totalorder %s20, 0
      %p88 = por %p86, %p87
      %p89 = scmp.ne.s32.totalorder %s75, %s76
      %p90 = scmp.eq.s32.totalorder %s21, 1
      %p91 = por %p89, %p90
      %p93 = scmp.ne.s32.totalorder %s76, %s92
      %p94 = scmp.eq.s32.totalorder %s21, 0
      %p95 = por %p93, %p94
      %p96 = scmp.le.s32.totalorder 1, %s15
      %p97 = scmp.lt.s32.totalorder %s15, 3
      %p98 = pnand %p96, %p97
      %p99 = pneg %p98
      // Predicated region
      $region9: #{tpu_custom_call.1} parent=5 // pred_check
        _
      $region10: #{tpu_custom_call.1} parent=5 // pred_check_branch
        %101 = sbr.rel (%p98) target = $region12
      $region11: #{tpu_custom_call.1} parent=5 // pred_region
        %s102 = ssub.s32 %s15, 1
        // Predicated region
        $region13: #{tpu_custom_call.1} parent=11 // pred_check
          %p103 = pneg %p62
        $region14: #{tpu_custom_call.1} parent=11 // pred_check_branch
          %105 = sbr.rel (%p103) target = $region16
        $region15: #{tpu_custom_call.1} parent=11 // pred_region
          %107 = vsyncadd [#allocation5], 0
          %s109 = sshll.u32 %s1, 4
          %s110 = int_to_ptr.hbm [resolvable:$true] %s109
          %112 = dma.hbm_to_smem %s110, 16, [#allocation6], [#allocation5]
        $region16: #{tpu_custom_call.1} parent=11 // pred_fallthru
          _
      $region12: #{tpu_custom_call.1} parent=5 // pred_fallthru
        _
      %p113 = scmp.lt.s32.totalorder %s15, 2
      // Predicated region
      $region17: #{tpu_custom_call.1} parent=5 // pred_check
        %p114 = pneg %p113
      $region18: #{tpu_custom_call.1} parent=5 // pred_check_branch
        %116 = sbr.rel (%p114) target = $region20
      $region19: #{tpu_custom_call.1} parent=5 // pred_region
        // Predicated region
        $region21: #{tpu_custom_call.1} parent=19 // pred_check
          %p117 = pneg %p35
        $region22: #{tpu_custom_call.1} parent=19 // pred_check_branch
          %119 = sbr.rel (%p117) target = $region24
        $region23: #{tpu_custom_call.1} parent=19 // pred_region
          %s120 = sand.u32 %s25, 1
          %s121 = scalar_lea.sflag [#allocation3], %s120
          %s122 = sand.u32 %s25, 1
          %s123 = smul.addr %s122, 96
          %s124 = scalar_lea.vmem [#allocation2], %s123
          %126 = vsyncadd %s121, 0
          %s127 = smul.addr %s15, 12
          %s128 = smul.addr %s127, 8
          %s129 = scalar_lea.hbm %s0, %s128
          %s130 = sshll.u32 %s129, 4
          %s131 = int_to_ptr.hbm [resolvable:$true] %s130
          %s132 = sshll.u32 %s124, 4
          %s133 = int_to_ptr.vmem [resolvable:$true] %s132
          %138 = dma.hbm_to_vmem [thread:$0]  %s131, 1536, %s133, %s121, 128, 128, 8
        $region24: #{tpu_custom_call.1} parent=19 // pred_fallthru
          _
      $region20: #{tpu_custom_call.1} parent=5 // pred_fallthru
        _
      %p139 = scmp.le.s32.totalorder 1, %s15
      %p140 = scmp.lt.s32.totalorder %s15, 3
      %p141 = pnand %p139, %p140
      %p142 = pneg %p141
      // Predicated region
      $region25: #{tpu_custom_call.1} parent=5 // pred_check
        _
      $region26: #{tpu_custom_call.1} parent=5 // pred_check_branch
        %144 = sbr.rel (%p141) target = $region28
      $region27: #{tpu_custom_call.1} parent=5 // pred_region
        %s145 = ssub.s32 %s15, 1
        %s146 = sand.u32 %s28, 1
        %s147 = scalar_lea.sflag [#allocation3], %s146
        %s148 = sand.u32 %s28, 1
        %s149 = smul.addr %s148, 96
        %s150 = scalar_lea.vmem [#allocation2], %s149
        // Predicated region
        $region29: #{tpu_custom_call.1} parent=27 // pred_check
          %p151 = pneg %p41
        $region30: #{tpu_custom_call.1} parent=27 // pred_check_branch
          %153 = sbr.rel (%p151) target = $region32
        $region31: #{tpu_custom_call.1} parent=27 // pred_region
          %155 = dma.done %s147, 1536
        $region32: #{tpu_custom_call.1} parent=27 // pred_fallthru
          _
        // Predicated region
        $region33: #{tpu_custom_call.1} parent=27 // pred_check
          %p156 = pneg %p62
        $region34: #{tpu_custom_call.1} parent=27 // pred_check_branch
          %158 = sbr.rel (%p156) target = $region36
        $region35: #{tpu_custom_call.1} parent=27 // pred_region
          %160 = dma.done [#allocation5], 16
        $region36: #{tpu_custom_call.1} parent=27 // pred_fallthru
          _
        %161 = sfence
        %s162 = sand.u32 %s28, 1
        %s163 = scalar_lea.sflag [#allocation3], %s162
        %s164 = sand.u32 %s28, 1
        %s165 = smul.addr %s164, 96
        %s166 = scalar_lea.vmem [#allocation2], %s165
        %p167 = pneg %p41
        %p168 = pneg %p38
        %p169 = pneg %p62
        %p170 = pneg %p59
        %p171 = pneg %p88
        %p172 = pneg %p85
        %s173 = sand.u32 %s75, 1
        %s174 = scalar_lea.sflag [#allocation4], %s173
        %s175 = sand.u32 %s75, 1
        %s176 = smul.addr %s175, 24
        %s177 = scalar_lea.vmem [#allocation7], %s176
        %s178 = sld [smem:[#allocation6]]
        %s179 = sld [smem:[#allocation6 + $0x1]]
        %s180 = sld [smem:[#allocation6 + $0x2]]
        %s181 = sld [smem:[#allocation6 + $0x3]]
        %s182 = sld [smem:[#allocation6 + $0x4]]
        %s183 = sld [smem:[#allocation6 + $0x5]]
        %s184 = sld [smem:[#allocation6 + $0x6]]
        %s185 = sld [smem:[#allocation6 + $0x7]]
        %s186 = sld [smem:[#allocation6 + $0x8]]
        %s187 = sld [smem:[#allocation6 + $0x9]]
        %s188 = sld [smem:[#allocation6 + $0xa]]
        %s189 = sld [smem:[#allocation6 + $0xb]]
        %s190 = sld [smem:[#allocation6 + $0xc]]
        %s191 = sld [smem:[#allocation6 + $0xd]]
        %s192 = sld [smem:[#allocation6 + $0xe]]
        %s193 = sld [smem:[#allocation6 + $0xf]]
        %s194 = sld [smem:[#allocation6 + $0x10]]
        %s195 = sld [smem:[#allocation6 + $0x11]]
        %s196 = sld [smem:[#allocation6 + $0x12]]
        %s197 = sld [smem:[#allocation6 + $0x13]]
        %s198 = sld [smem:[#allocation6 + $0x14]]
        %s199 = sld [smem:[#allocation6 + $0x15]]
        %s200 = sld [smem:[#allocation6 + $0x16]]
        %s201 = sld [smem:[#allocation6 + $0x17]]
        %s202 = sld [smem:[#allocation6 + $0x18]]
        %s203 = sld [smem:[#allocation6 + $0x19]]
        %s204 = sld [smem:[#allocation6 + $0x1a]]
        %s205 = sld [smem:[#allocation6 + $0x1b]]
        %s206 = sld [smem:[#allocation6 + $0x1c]]
        %s207 = sld [smem:[#allocation6 + $0x1d]]
        %s208 = sld [smem:[#allocation6 + $0x1e]]
        %s209 = sld [smem:[#allocation6 + $0x1f]]
        %s210 = sld [smem:[#allocation6 + $0x20]]
        %s211 = sld [smem:[#allocation6 + $0x21]]
        %s212 = sld [smem:[#allocation6 + $0x22]]
        %s213 = sld [smem:[#allocation6 + $0x23]]
        %s214 = sld [smem:[#allocation6 + $0x24]]
        %s215 = sld [smem:[#allocation6 + $0x25]]
        %s216 = sld [smem:[#allocation6 + $0x26]]
        %s217 = sld [smem:[#allocation6 + $0x27]]
        %s218 = sld [smem:[#allocation6 + $0x28]]
        %s219 = sld [smem:[#allocation6 + $0x29]]
        %s220 = sld [smem:[#allocation6 + $0x2a]]
        %s221 = sld [smem:[#allocation6 + $0x2b]]
        %s222 = sld [smem:[#allocation6 + $0x2c]]
        %s223 = sld [smem:[#allocation6 + $0x2d]]
        %s224 = sld [smem:[#allocation6 + $0x2e]]
        %s225 = sld [smem:[#allocation6 + $0x2f]]
        %s226 = sld [smem:[#allocation6 + $0x30]]
        %s227 = sld [smem:[#allocation6 + $0x31]]
        %s228 = sld [smem:[#allocation6 + $0x32]]
        %s229 = sld [smem:[#allocation6 + $0x33]]
        %s230 = sld [smem:[#allocation6 + $0x34]]
        %s231 = sld [smem:[#allocation6 + $0x35]]
        %s232 = sld [smem:[#allocation6 + $0x36]]
        %s233 = sld [smem:[#allocation6 + $0x37]]
        %s234 = sld [smem:[#allocation6 + $0x38]]
        %s235 = sld [smem:[#allocation6 + $0x39]]
        %s236 = sld [smem:[#allocation6 + $0x3a]]
        %s237 = sld [smem:[#allocation6 + $0x3b]]
        %s238 = sld [smem:[#allocation6 + $0x3c]]
        %s239 = sld [smem:[#allocation6 + $0x3d]]
        %s240 = sld [smem:[#allocation6 + $0x3e]]
        %s241 = sld [smem:[#allocation6 + $0x3f]]
        %s242 = sld [smem:[#allocation6 + $0x40]]
        %s243 = sld [smem:[#allocation6 + $0x41]]
        %s244 = sld [smem:[#allocation6 + $0x42]]
        %s245 = sld [smem:[#allocation6 + $0x43]]
        %s246 = sld [smem:[#allocation6 + $0x44]]
        %s247 = sld [smem:[#allocation6 + $0x45]]
        %s248 = sld [smem:[#allocation6 + $0x46]]
        %s249 = sld [smem:[#allocation6 + $0x47]]
        %s250 = sld [smem:[#allocation6 + $0x48]]
        %s251 = sld [smem:[#allocation6 + $0x49]]
        %s252 = sld [smem:[#allocation6 + $0x4a]]
        %s253 = sld [smem:[#allocation6 + $0x4b]]
        %s254 = sld [smem:[#allocation6 + $0x4c]]
        %s255 = sld [smem:[#allocation6 + $0x4d]]
        %s256 = sld [smem:[#allocation6 + $0x4e]]
        %s257 = sld [smem:[#allocation6 + $0x4f]]
        %s258 = sld [smem:[#allocation6 + $0x50]]
        %s259 = sld [smem:[#allocation6 + $0x51]]
        %s260 = sld [smem:[#allocation6 + $0x52]]
        %s261 = sld [smem:[#allocation6 + $0x53]]
        %s262 = sld [smem:[#allocation6 + $0x54]]
        %s263 = sld [smem:[#allocation6 + $0x55]]
        %s264 = sld [smem:[#allocation6 + $0x56]]
        %s265 = sld [smem:[#allocation6 + $0x57]]
        %s266 = sld [smem:[#allocation6 + $0x58]]
        %s267 = sld [smem:[#allocation6 + $0x59]]
        %s268 = sld [smem:[#allocation6 + $0x5a]]
        %s269 = sld [smem:[#allocation6 + $0x5b]]
        %s270 = sld [smem:[#allocation6 + $0x5c]]
        %s271 = sld [smem:[#allocation6 + $0x5d]]
        %s272 = sld [smem:[#allocation6 + $0x5e]]
        %s273 = sld [smem:[#allocation6 + $0x5f]]
        %s274 = sld [smem:[#allocation6 + $0x60]]
        %s275 = sld [smem:[#allocation6 + $0x61]]
        %v276 = vld [vmem:[%s150] sm:$0xff]
        %v277 = vld [vmem:[%s150 + $0x8] sm:$0xff]
        %v278 = vld [vmem:[%s150 + $0x10] sm:$0xff]
        %v279 = vld [vmem:[%s150 + $0x18] sm:$0xff]
        %v280 = vld [vmem:[%s150 + $0x20] sm:$0xff]
        %v281 = vld [vmem:[%s150 + $0x28] sm:$0xff]
        %v282 = vld [vmem:[%s150 + $0x30] sm:$0xff]
        %v283 = vld [vmem:[%s150 + $0x38] sm:$0xff]
        %v284 = vld [vmem:[%s150 + $0x40] sm:$0xff]
        %v285 = vld [vmem:[%s150 + $0x48] sm:$0xff]
        %v286 = vld [vmem:[%s150 + $0x50] sm:$0xff]
        %v287 = vld [vmem:[%s150 + $0x58] sm:$0xff]
        %v288 = vmax.f32 %v276, %v282
        %v289 = vmax.f32 %v279, %v285
        %v290 = vmax.f32 %v288, %v289
        %v291 = vmax.f32 %v277, %v283
        %v292 = vmax.f32 %v280, %v286
        %v293 = vmax.f32 %v291, %v292
        %v294 = vmax.f32 %v278, %v284
        %v295 = vmax.f32 %v281, %v287
        %v296 = vmax.f32 %v294, %v295
        %v297 = vadd.f32 %v276, %v279
        %v298 = vadd.f32 %v297, %v282
        %v299 = vadd.f32 %v298, %v285
        %v300 = vadd.f32 %v277, %v280
        %v301 = vadd.f32 %v300, %v283
        %v302 = vadd.f32 %v301, %v286
        %v303 = vadd.f32 %v278, %v281
        %v304 = vadd.f32 %v303, %v284
        %v305 = vadd.f32 %v304, %v287
        %v306 = vmul.f32 %v299, 0.25
        %v307 = vmul.f32 %v302, 0.25
        %v308 = vmul.f32 %v305, 0.25
        %v309 = vrot.slane %v290, 5
        %v310 = vrot.slane %v293, 5
        %v311 = vrot.slane %v296, 5
        %v312 = vlaneseq
        %v313 = vshrl.u32 %v312, 7
        %vm314 = vcmp.lt.s32.totalorder %v313, 3
        %v315 = vsel %vm314, %v310, %v311
        %v316 = vsel %vm314, %v309, %v310
        %v317 = vsel %vm314, %v311, %v309
        %318 = vrot.lane.b32.xlu0 %v317, 3
        %v319 = vpop.permute.xlu0 %318
        %320 = vrot.lane.b32.xlu0 %v316, 3
        %v321 = vpop.permute.xlu0 %320
        %322 = vrot.lane.b32.xlu0 %v315, 3
        %v323 = vpop.permute.xlu0 %322
        %v324 = vstv %s178
        %v325 = vmul.f32 %v324, %v319
        %v326 = vmul.f32 %v324, %v321
        %v327 = vmul.f32 %v324, %v323
        %v328 = vadd.f32 %v325, 0.0
        %v329 = vadd.f32 %v326, 0.0
        %v330 = vadd.f32 %v327, 0.0
        %331 = vrot.lane.b32.xlu0 %v317, 2
        %v332 = vpop.permute.xlu0 %331
        %333 = vrot.lane.b32.xlu0 %v316, 2
        %v334 = vpop.permute.xlu0 %333
        %335 = vrot.lane.b32.xlu0 %v315, 2
        %v336 = vpop.permute.xlu0 %335
        %v337 = vstv %s179
        %v338 = vmul.f32 %v337, %v332
        %v339 = vmul.f32 %v337, %v334
        %v340 = vmul.f32 %v337, %v336
        %v341 = vadd.f32 %v338, 0.0
        %v342 = vadd.f32 %v339, 0.0
        %v343 = vadd.f32 %v340, 0.0
        %344 = vrot.lane.b32.xlu0 %v317, 1
        %v345 = vpop.permute.xlu0 %344
        %346 = vrot.lane.b32.xlu0 %v316, 1
        %v347 = vpop.permute.xlu0 %346
        %348 = vrot.lane.b32.xlu0 %v315, 1
        %v349 = vpop.permute.xlu0 %348
        %v350 = vstv %s180
        %v351 = vmul.f32 %v350, %v345
        %v352 = vmul.f32 %v350, %v347
        %v353 = vmul.f32 %v350, %v349
        %v354 = vadd.f32 %v351, 0.0
        %v355 = vadd.f32 %v352, 0.0
        %v356 = vadd.f32 %v353, 0.0
        %v357 = vstv %s181
        %v358 = vmul.f32 %v357, %v317
        %v359 = vmul.f32 %v357, %v316
        %v360 = vmul.f32 %v357, %v315
        %v361 = vadd.f32 %v358, 0.0
        %v362 = vadd.f32 %v359, 0.0
        %v363 = vadd.f32 %v360, 0.0
        %364 = vrot.lane.b32.xlu0 %v317, 127
        %v365 = vpop.permute.xlu0 %364
        %366 = vrot.lane.b32.xlu0 %v316, 127
        %v367 = vpop.permute.xlu0 %366
        %368 = vrot.lane.b32.xlu0 %v315, 127
        %v369 = vpop.permute.xlu0 %368
        %v370 = vstv %s182
        %v371 = vmul.f32 %v370, %v365
        %v372 = vmul.f32 %v370, %v367
        %v373 = vmul.f32 %v370, %v369
        %v374 = vadd.f32 %v328, %v371
        %v375 = vadd.f32 %v329, %v372
        %v376 = vadd.f32 %v330, %v373
        %377 = vrot.lane.b32.xlu0 %v317, 126
        %v378 = vpop.permute.xlu0 %377
        %379 = vrot.lane.b32.xlu0 %v316, 126
        %v380 = vpop.permute.xlu0 %379
        %381 = vrot.lane.b32.xlu0 %v315, 126
        %v382 = vpop.permute.xlu0 %381
        %v383 = vstv %s183
        %v384 = vmul.f32 %v383, %v378
        %v385 = vmul.f32 %v383, %v380
        %v386 = vmul.f32 %v383, %v382
        %v387 = vadd.f32 %v341, %v384
        %v388 = vadd.f32 %v342, %v385
        %v389 = vadd.f32 %v343, %v386
        %390 = vrot.lane.b32.xlu0 %v317, 125
        %v391 = vpop.permute.xlu0 %390
        %392 = vrot.lane.b32.xlu0 %v316, 125
        %v393 = vpop.permute.xlu0 %392
        %394 = vrot.lane.b32.xlu0 %v315, 125
        %v395 = vpop.permute.xlu0 %394
        %v396 = vstv %s184
        %v397 = vmul.f32 %v396, %v391
        %v398 = vmul.f32 %v396, %v393
        %v399 = vmul.f32 %v396, %v395
        %v400 = vadd.f32 %v354, %v397
        %v401 = vadd.f32 %v355, %v398
        %v402 = vadd.f32 %v356, %v399
        %v403 = vrot.slane %v290, 6
        %v404 = vrot.slane %v293, 6
        %v405 = vrot.slane %v296, 6
        %vm406 = vcmp.lt.s32.totalorder %v313, 2
        %v407 = vsel %vm406, %v404, %v405
        %v408 = vsel %vm406, %v403, %v404
        %v409 = vsel %vm406, %v405, %v403
        %410 = vrot.lane.b32.xlu0 %v409, 3
        %v411 = vpop.permute.xlu0 %410
        %412 = vrot.lane.b32.xlu0 %v408, 3
        %v413 = vpop.permute.xlu0 %412
        %414 = vrot.lane.b32.xlu0 %v407, 3
        %v415 = vpop.permute.xlu0 %414
        %v416 = vstv %s185
        %v417 = vmul.f32 %v416, %v411
        %v418 = vmul.f32 %v416, %v413
        %v419 = vmul.f32 %v416, %v415
        %v420 = vadd.f32 %v361, %v417
        %v421 = vadd.f32 %v362, %v418
        %v422 = vadd.f32 %v363, %v419
        %423 = vrot.lane.b32.xlu0 %v409, 2
        %v424 = vpop.permute.xlu0 %423
        %425 = vrot.lane.b32.xlu0 %v408, 2
        %v426 = vpop.permute.xlu0 %425
        %427 = vrot.lane.b32.xlu0 %v407, 2
        %v428 = vpop.permute.xlu0 %427
        %v429 = vstv %s186
        %v430 = vmul.f32 %v429, %v424
        %v431 = vmul.f32 %v429, %v426
        %v432 = vmul.f32 %v429, %v428
        %v433 = vadd.f32 %v374, %v430
        %v434 = vadd.f32 %v375, %v431
        %v435 = vadd.f32 %v376, %v432
        %436 = vrot.lane.b32.xlu0 %v409, 1
        %v437 = vpop.permute.xlu0 %436
        %438 = vrot.lane.b32.xlu0 %v408, 1
        %v439 = vpop.permute.xlu0 %438
        %440 = vrot.lane.b32.xlu0 %v407, 1
        %v441 = vpop.permute.xlu0 %440
        %v442 = vstv %s187
        %v443 = vmul.f32 %v442, %v437
        %v444 = vmul.f32 %v442, %v439
        %v445 = vmul.f32 %v442, %v441
        %v446 = vadd.f32 %v387, %v443
        %v447 = vadd.f32 %v388, %v444
        %v448 = vadd.f32 %v389, %v445
        %v449 = vstv %s188
        %v450 = vmul.f32 %v449, %v409
        %v451 = vmul.f32 %v449, %v408
        %v452 = vmul.f32 %v449, %v407
        %v453 = vadd.f32 %v400, %v450
        %v454 = vadd.f32 %v401, %v451
        %v455 = vadd.f32 %v402, %v452
        %456 = vrot.lane.b32.xlu0 %v409, 127
        %v457 = vpop.permute.xlu0 %456
        %458 = vrot.lane.b32.xlu0 %v408, 127
        %v459 = vpop.permute.xlu0 %458
        %460 = vrot.lane.b32.xlu0 %v407, 127
        %v461 = vpop.permute.xlu0 %460
        %v462 = vstv %s189
        %v463 = vmul.f32 %v462, %v457
        %v464 = vmul.f32 %v462, %v459
        %v465 = vmul.f32 %v462, %v461
        %v466 = vadd.f32 %v420, %v463
        %v467 = vadd.f32 %v421, %v464
        %v468 = vadd.f32 %v422, %v465
        %469 = vrot.lane.b32.xlu0 %v409, 126
        %v470 = vpop.permute.xlu0 %469
        %471 = vrot.lane.b32.xlu0 %v408, 126
        %v472 = vpop.permute.xlu0 %471
        %473 = vrot.lane.b32.xlu0 %v407, 126
        %v474 = vpop.permute.xlu0 %473
        %v475 = vstv %s190
        %v476 = vmul.f32 %v475, %v470
        %v477 = vmul.f32 %v475, %v472
        %v478 = vmul.f32 %v475, %v474
        %v479 = vadd.f32 %v433, %v476
        %v480 = vadd.f32 %v434, %v477
        %v481 = vadd.f32 %v435, %v478
        %482 = vrot.lane.b32.xlu0 %v409, 125
        %v483 = vpop.permute.xlu0 %482
        %484 = vrot.lane.b32.xlu0 %v408, 125
        %v485 = vpop.permute.xlu0 %484
        %486 = vrot.lane.b32.xlu0 %v407, 125
        %v487 = vpop.permute.xlu0 %486
        %v488 = vstv %s191
        %v489 = vmul.f32 %v488, %v483
        %v490 = vmul.f32 %v488, %v485
        %v491 = vmul.f32 %v488, %v487
        %v492 = vadd.f32 %v446, %v489
        %v493 = vadd.f32 %v447, %v490
        %v494 = vadd.f32 %v448, %v491
        %v495 = vrot.slane %v290, 7
        %v496 = vrot.slane %v293, 7
        %v497 = vrot.slane %v296, 7
        %vm498 = vcmp.lt.s32.totalorder %v313, 1
        %v499 = vsel %vm498, %v496, %v497
        %v500 = vsel %vm498, %v495, %v496
        %v501 = vsel %vm498, %v497, %v495
        %502 = vrot.lane.b32.xlu0 %v501, 3
        %v503 = vpop.permute.xlu0 %502
        %504 = vrot.lane.b32.xlu0 %v500, 3
        %v505 = vpop.permute.xlu0 %504
        %506 = vrot.lane.b32.xlu0 %v499, 3
        %v507 = vpop.permute.xlu0 %506
        %v508 = vstv %s192
        %v509 = vmul.f32 %v508, %v503
        %v510 = vmul.f32 %v508, %v505
        %v511 = vmul.f32 %v508, %v507
        %v512 = vadd.f32 %v453, %v509
        %v513 = vadd.f32 %v454, %v510
        %v514 = vadd.f32 %v455, %v511
        %515 = vrot.lane.b32.xlu0 %v501, 2
        %v516 = vpop.permute.xlu0 %515
        %517 = vrot.lane.b32.xlu0 %v500, 2
        %v518 = vpop.permute.xlu0 %517
        %519 = vrot.lane.b32.xlu0 %v499, 2
        %v520 = vpop.permute.xlu0 %519
        %v521 = vstv %s193
        %v522 = vmul.f32 %v521, %v516
        %v523 = vmul.f32 %v521, %v518
        %v524 = vmul.f32 %v521, %v520
        %v525 = vadd.f32 %v466, %v522
        %v526 = vadd.f32 %v467, %v523
        %v527 = vadd.f32 %v468, %v524
        %528 = vrot.lane.b32.xlu0 %v501, 1
        %v529 = vpop.permute.xlu0 %528
        %530 = vrot.lane.b32.xlu0 %v500, 1
        %v531 = vpop.permute.xlu0 %530
        %532 = vrot.lane.b32.xlu0 %v499, 1
        %v533 = vpop.permute.xlu0 %532
        %v534 = vstv %s194
        %v535 = vmul.f32 %v534, %v529
        %v536 = vmul.f32 %v534, %v531
        %v537 = vmul.f32 %v534, %v533
        %v538 = vadd.f32 %v479, %v535
        %v539 = vadd.f32 %v480, %v536
        %v540 = vadd.f32 %v481, %v537
        %v541 = vstv %s195
        %v542 = vmul.f32 %v541, %v501
        %v543 = vmul.f32 %v541, %v500
        %v544 = vmul.f32 %v541, %v499
        %v545 = vadd.f32 %v492, %v542
        %v546 = vadd.f32 %v493, %v543
        %v547 = vadd.f32 %v494, %v544
        %548 = vrot.lane.b32.xlu0 %v501, 127
        %v549 = vpop.permute.xlu0 %548
        %550 = vrot.lane.b32.xlu0 %v500, 127
        %v551 = vpop.permute.xlu0 %550
        %552 = vrot.lane.b32.xlu0 %v499, 127
        %v553 = vpop.permute.xlu0 %552
        %v554 = vstv %s196
        %v555 = vmul.f32 %v554, %v549
        %v556 = vmul.f32 %v554, %v551
        %v557 = vmul.f32 %v554, %v553
        %v558 = vadd.f32 %v512, %v555
        %v559 = vadd.f32 %v513, %v556
        %v560 = vadd.f32 %v514, %v557
        %561 = vrot.lane.b32.xlu0 %v501, 126
        %v562 = vpop.permute.xlu0 %561
        %563 = vrot.lane.b32.xlu0 %v500, 126
        %v564 = vpop.permute.xlu0 %563
        %565 = vrot.lane.b32.xlu0 %v499, 126
        %v566 = vpop.permute.xlu0 %565
        %v567 = vstv %s197
        %v568 = vmul.f32 %v567, %v562
        %v569 = vmul.f32 %v567, %v564
        %v570 = vmul.f32 %v567, %v566
        %v571 = vadd.f32 %v525, %v568
        %v572 = vadd.f32 %v526, %v569
        %v573 = vadd.f32 %v527, %v570
        %574 = vrot.lane.b32.xlu0 %v501, 125
        %v575 = vpop.permute.xlu0 %574
        %576 = vrot.lane.b32.xlu0 %v500, 125
        %v577 = vpop.permute.xlu0 %576
        %578 = vrot.lane.b32.xlu0 %v499, 125
        %v579 = vpop.permute.xlu0 %578
        %v580 = vstv %s198
        %v581 = vmul.f32 %v580, %v575
        %v582 = vmul.f32 %v580, %v577
        %v583 = vmul.f32 %v580, %v579
        %v584 = vadd.f32 %v538, %v581
        %v585 = vadd.f32 %v539, %v582
        %v586 = vadd.f32 %v540, %v583
        %587 = vrot.lane.b32.xlu0 %v290, 3
        %v588 = vpop.permute.xlu0 %587
        %589 = vrot.lane.b32.xlu0 %v293, 3
        %v590 = vpop.permute.xlu0 %589
        %591 = vrot.lane.b32.xlu0 %v296, 3
        %v592 = vpop.permute.xlu0 %591
        %v593 = vstv %s199
        %v594 = vmul.f32 %v593, %v588
        %v595 = vmul.f32 %v593, %v590
        %v596 = vmul.f32 %v593, %v592
        %v597 = vadd.f32 %v545, %v594
        %v598 = vadd.f32 %v546, %v595
        %v599 = vadd.f32 %v547, %v596
        %600 = vrot.lane.b32.xlu0 %v290, 2
        %v601 = vpop.permute.xlu0 %600
        %602 = vrot.lane.b32.xlu0 %v293, 2
        %v603 = vpop.permute.xlu0 %602
        %604 = vrot.lane.b32.xlu0 %v296, 2
        %v605 = vpop.permute.xlu0 %604
        %v606 = vstv %s200
        %v607 = vmul.f32 %v606, %v601
        %v608 = vmul.f32 %v606, %v603
        %v609 = vmul.f32 %v606, %v605
        %v610 = vadd.f32 %v558, %v607
        %v611 = vadd.f32 %v559, %v608
        %v612 = vadd.f32 %v560, %v609
        %613 = vrot.lane.b32.xlu0 %v290, 1
        %v614 = vpop.permute.xlu0 %613
        %615 = vrot.lane.b32.xlu0 %v293, 1
        %v616 = vpop.permute.xlu0 %615
        %617 = vrot.lane.b32.xlu0 %v296, 1
        %v618 = vpop.permute.xlu0 %617
        %v619 = vstv %s201
        %v620 = vmul.f32 %v619, %v614
        %v621 = vmul.f32 %v619, %v616
        %v622 = vmul.f32 %v619, %v618
        %v623 = vadd.f32 %v571, %v620
        %v624 = vadd.f32 %v572, %v621
        %v625 = vadd.f32 %v573, %v622
        %v626 = vstv %s202
        %v627 = vmul.f32 %v626, %v290
        %v628 = vmul.f32 %v626, %v293
        %v629 = vmul.f32 %v626, %v296
        %v630 = vadd.f32 %v584, %v627
        %v631 = vadd.f32 %v585, %v628
        %v632 = vadd.f32 %v586, %v629
        %633 = vrot.lane.b32.xlu0 %v290, 127
        %v634 = vpop.permute.xlu0 %633
        %635 = vrot.lane.b32.xlu0 %v293, 127
        %v636 = vpop.permute.xlu0 %635
        %637 = vrot.lane.b32.xlu0 %v296, 127
        %v638 = vpop.permute.xlu0 %637
        %v639 = vstv %s203
        %v640 = vmul.f32 %v639, %v634
        %v641 = vmul.f32 %v639, %v636
        %v642 = vmul.f32 %v639, %v638
        %v643 = vadd.f32 %v597, %v640
        %v644 = vadd.f32 %v598, %v641
        %v645 = vadd.f32 %v599, %v642
        %646 = vrot.lane.b32.xlu0 %v290, 126
        %v647 = vpop.permute.xlu0 %646
        %648 = vrot.lane.b32.xlu0 %v293, 126
        %v649 = vpop.permute.xlu0 %648
        %650 = vrot.lane.b32.xlu0 %v296, 126
        %v651 = vpop.permute.xlu0 %650
        %v652 = vstv %s204
        %v653 = vmul.f32 %v652, %v647
        %v654 = vmul.f32 %v652, %v649
        %v655 = vmul.f32 %v652, %v651
        %v656 = vadd.f32 %v610, %v653
        %v657 = vadd.f32 %v611, %v654
        %v658 = vadd.f32 %v612, %v655
        %659 = vrot.lane.b32.xlu0 %v290, 125
        %v660 = vpop.permute.xlu0 %659
        %661 = vrot.lane.b32.xlu0 %v293, 125
        %v662 = vpop.permute.xlu0 %661
        %663 = vrot.lane.b32.xlu0 %v296, 125
        %v664 = vpop.permute.xlu0 %663
        %v665 = vstv %s205
        %v666 = vmul.f32 %v665, %v660
        %v667 = vmul.f32 %v665, %v662
        %v668 = vmul.f32 %v665, %v664
        %v669 = vadd.f32 %v623, %v666
        %v670 = vadd.f32 %v624, %v667
        %v671 = vadd.f32 %v625, %v668
        %v672 = vrot.slane %v290, 1
        %v673 = vrot.slane %v293, 1
        %v674 = vrot.slane %v296, 1
        %vm675 = vcmp.lt.s32.totalorder %v313, 7
        %v676 = vsel %vm675, %v673, %v674
        %v677 = vsel %vm675, %v672, %v673
        %v678 = vsel %vm675, %v674, %v672
        %679 = vrot.lane.b32.xlu0 %v677, 3
        %v680 = vpop.permute.xlu0 %679
        %681 = vrot.lane.b32.xlu0 %v676, 3
        %v682 = vpop.permute.xlu0 %681
        %683 = vrot.lane.b32.xlu0 %v678, 3
        %v684 = vpop.permute.xlu0 %683
        %v685 = vstv %s206
        %v686 = vmul.f32 %v685, %v680
        %v687 = vmul.f32 %v685, %v682
        %v688 = vmul.f32 %v685, %v684
        %v689 = vadd.f32 %v630, %v686
        %v690 = vadd.f32 %v631, %v687
        %v691 = vadd.f32 %v632, %v688
        %692 = vrot.lane.b32.xlu0 %v677, 2
        %v693 = vpop.permute.xlu0 %692
        %694 = vrot.lane.b32.xlu0 %v676, 2
        %v695 = vpop.permute.xlu0 %694
        %696 = vrot.lane.b32.xlu0 %v678, 2
        %v697 = vpop.permute.xlu0 %696
        %v698 = vstv %s207
        %v699 = vmul.f32 %v698, %v693
        %v700 = vmul.f32 %v698, %v695
        %v701 = vmul.f32 %v698, %v697
        %v702 = vadd.f32 %v643, %v699
        %v703 = vadd.f32 %v644, %v700
        %v704 = vadd.f32 %v645, %v701
        %705 = vrot.lane.b32.xlu0 %v677, 1
        %v706 = vpop.permute.xlu0 %705
        %707 = vrot.lane.b32.xlu0 %v676, 1
        %v708 = vpop.permute.xlu0 %707
        %709 = vrot.lane.b32.xlu0 %v678, 1
        %v710 = vpop.permute.xlu0 %709
        %v711 = vstv %s208
        %v712 = vmul.f32 %v711, %v706
        %v713 = vmul.f32 %v711, %v708
        %v714 = vmul.f32 %v711, %v710
        %v715 = vadd.f32 %v656, %v712
        %v716 = vadd.f32 %v657, %v713
        %v717 = vadd.f32 %v658, %v714
        %v718 = vstv %s209
        %v719 = vmul.f32 %v718, %v677
        %v720 = vmul.f32 %v718, %v676
        %v721 = vmul.f32 %v718, %v678
        %v722 = vadd.f32 %v669, %v719
        %v723 = vadd.f32 %v670, %v720
        %v724 = vadd.f32 %v671, %v721
        %725 = vrot.lane.b32.xlu0 %v677, 127
        %v726 = vpop.permute.xlu0 %725
        %727 = vrot.lane.b32.xlu0 %v676, 127
        %v728 = vpop.permute.xlu0 %727
        %729 = vrot.lane.b32.xlu0 %v678, 127
        %v730 = vpop.permute.xlu0 %729
        %v731 = vstv %s210
        %v732 = vmul.f32 %v731, %v726
        %v733 = vmul.f32 %v731, %v728
        %v734 = vmul.f32 %v731, %v730
        %v735 = vadd.f32 %v689, %v732
        %v736 = vadd.f32 %v690, %v733
        %v737 = vadd.f32 %v691, %v734
        %738 = vrot.lane.b32.xlu0 %v677, 126
        %v739 = vpop.permute.xlu0 %738
        %740 = vrot.lane.b32.xlu0 %v676, 126
        %v741 = vpop.permute.xlu0 %740
        %742 = vrot.lane.b32.xlu0 %v678, 126
        %v743 = vpop.permute.xlu0 %742
        %v744 = vstv %s211
        %v745 = vmul.f32 %v744, %v739
        %v746 = vmul.f32 %v744, %v741
        %v747 = vmul.f32 %v744, %v743
        %v748 = vadd.f32 %v702, %v745
        %v749 = vadd.f32 %v703, %v746
        %v750 = vadd.f32 %v704, %v747
        %751 = vrot.lane.b32.xlu0 %v677, 125
        %v752 = vpop.permute.xlu0 %751
        %753 = vrot.lane.b32.xlu0 %v676, 125
        %v754 = vpop.permute.xlu0 %753
        %755 = vrot.lane.b32.xlu0 %v678, 125
        %v756 = vpop.permute.xlu0 %755
        %v757 = vstv %s212
        %v758 = vmul.f32 %v757, %v752
        %v759 = vmul.f32 %v757, %v754
        %v760 = vmul.f32 %v757, %v756
        %v761 = vadd.f32 %v715, %v758
        %v762 = vadd.f32 %v716, %v759
        %v763 = vadd.f32 %v717, %v760
        %v764 = vrot.slane %v290, 2
        %v765 = vrot.slane %v293, 2
        %v766 = vrot.slane %v296, 2
        %vm767 = vcmp.lt.s32.totalorder %v313, 6
        %v768 = vsel %vm767, %v765, %v766
        %v769 = vsel %vm767, %v764, %v765
        %v770 = vsel %vm767, %v766, %v764
        %771 = vrot.lane.b32.xlu0 %v769, 3
        %v772 = vpop.permute.xlu0 %771
        %773 = vrot.lane.b32.xlu0 %v768, 3
        %v774 = vpop.permute.xlu0 %773
        %775 = vrot.lane.b32.xlu0 %v770, 3
        %v776 = vpop.permute.xlu0 %775
        %v777 = vstv %s213
        %v778 = vmul.f32 %v777, %v772
        %v779 = vmul.f32 %v777, %v774
        %v780 = vmul.f32 %v777, %v776
        %v781 = vadd.f32 %v722, %v778
        %v782 = vadd.f32 %v723, %v779
        %v783 = vadd.f32 %v724, %v780
        %784 = vrot.lane.b32.xlu0 %v769, 2
        %v785 = vpop.permute.xlu0 %784
        %786 = vrot.lane.b32.xlu0 %v768, 2
        %v787 = vpop.permute.xlu0 %786
        %788 = vrot.lane.b32.xlu0 %v770, 2
        %v789 = vpop.permute.xlu0 %788
        %v790 = vstv %s214
        %v791 = vmul.f32 %v790, %v785
        %v792 = vmul.f32 %v790, %v787
        %v793 = vmul.f32 %v790, %v789
        %v794 = vadd.f32 %v735, %v791
        %v795 = vadd.f32 %v736, %v792
        %v796 = vadd.f32 %v737, %v793
        %797 = vrot.lane.b32.xlu0 %v769, 1
        %v798 = vpop.permute.xlu0 %797
        %799 = vrot.lane.b32.xlu0 %v768, 1
        %v800 = vpop.permute.xlu0 %799
        %801 = vrot.lane.b32.xlu0 %v770, 1
        %v802 = vpop.permute.xlu0 %801
        %v803 = vstv %s215
        %v804 = vmul.f32 %v803, %v798
        %v805 = vmul.f32 %v803, %v800
        %v806 = vmul.f32 %v803, %v802
        %v807 = vadd.f32 %v748, %v804
        %v808 = vadd.f32 %v749, %v805
        %v809 = vadd.f32 %v750, %v806
        %v810 = vstv %s216
        %v811 = vmul.f32 %v810, %v769
        %v812 = vmul.f32 %v810, %v768
        %v813 = vmul.f32 %v810, %v770
        %v814 = vadd.f32 %v761, %v811
        %v815 = vadd.f32 %v762, %v812
        %v816 = vadd.f32 %v763, %v813
        %817 = vrot.lane.b32.xlu0 %v769, 127
        %v818 = vpop.permute.xlu0 %817
        %819 = vrot.lane.b32.xlu0 %v768, 127
        %v820 = vpop.permute.xlu0 %819
        %821 = vrot.lane.b32.xlu0 %v770, 127
        %v822 = vpop.permute.xlu0 %821
        %v823 = vstv %s217
        %v824 = vmul.f32 %v823, %v818
        %v825 = vmul.f32 %v823, %v820
        %v826 = vmul.f32 %v823, %v822
        %v827 = vadd.f32 %v781, %v824
        %v828 = vadd.f32 %v782, %v825
        %v829 = vadd.f32 %v783, %v826
        %830 = vrot.lane.b32.xlu0 %v769, 126
        %v831 = vpop.permute.xlu0 %830
        %832 = vrot.lane.b32.xlu0 %v768, 126
        %v833 = vpop.permute.xlu0 %832
        %834 = vrot.lane.b32.xlu0 %v770, 126
        %v835 = vpop.permute.xlu0 %834
        %v836 = vstv %s218
        %v837 = vmul.f32 %v836, %v831
        %v838 = vmul.f32 %v836, %v833
        %v839 = vmul.f32 %v836, %v835
        %v840 = vadd.f32 %v794, %v837
        %v841 = vadd.f32 %v795, %v838
        %v842 = vadd.f32 %v796, %v839
        %843 = vrot.lane.b32.xlu0 %v769, 125
        %v844 = vpop.permute.xlu0 %843
        %845 = vrot.lane.b32.xlu0 %v768, 125
        %v846 = vpop.permute.xlu0 %845
        %847 = vrot.lane.b32.xlu0 %v770, 125
        %v848 = vpop.permute.xlu0 %847
        %v849 = vstv %s219
        %v850 = vmul.f32 %v849, %v844
        %v851 = vmul.f32 %v849, %v846
        %v852 = vmul.f32 %v849, %v848
        %v853 = vadd.f32 %v807, %v850
        %v854 = vadd.f32 %v808, %v851
        %v855 = vadd.f32 %v809, %v852
        %v856 = vrot.slane %v290, 3
        %v857 = vrot.slane %v293, 3
        %v858 = vrot.slane %v296, 3
        %vm859 = vcmp.lt.s32.totalorder %v313, 5
        %v860 = vsel %vm859, %v857, %v858
        %v861 = vsel %vm859, %v856, %v857
        %v862 = vsel %vm859, %v858, %v856
        %863 = vrot.lane.b32.xlu0 %v861, 3
        %v864 = vpop.permute.xlu0 %863
        %865 = vrot.lane.b32.xlu0 %v860, 3
        %v866 = vpop.permute.xlu0 %865
        %867 = vrot.lane.b32.xlu0 %v862, 3
        %v868 = vpop.permute.xlu0 %867
        %v869 = vstv %s220
        %v870 = vmul.f32 %v869, %v864
        %v871 = vmul.f32 %v869, %v866
        %v872 = vmul.f32 %v869, %v868
        %v873 = vadd.f32 %v814, %v870
        %v874 = vadd.f32 %v815, %v871
        %v875 = vadd.f32 %v816, %v872
        %876 = vrot.lane.b32.xlu0 %v861, 2
        %v877 = vpop.permute.xlu0 %876
        %878 = vrot.lane.b32.xlu0 %v860, 2
        %v879 = vpop.permute.xlu0 %878
        %880 = vrot.lane.b32.xlu0 %v862, 2
        %v881 = vpop.permute.xlu0 %880
        %v882 = vstv %s221
        %v883 = vmul.f32 %v882, %v877
        %v884 = vmul.f32 %v882, %v879
        %v885 = vmul.f32 %v882, %v881
        %v886 = vadd.f32 %v827, %v883
        %v887 = vadd.f32 %v828, %v884
        %v888 = vadd.f32 %v829, %v885
        %889 = vrot.lane.b32.xlu0 %v861, 1
        %v890 = vpop.permute.xlu0 %889
        %891 = vrot.lane.b32.xlu0 %v860, 1
        %v892 = vpop.permute.xlu0 %891
        %893 = vrot.lane.b32.xlu0 %v862, 1
        %v894 = vpop.permute.xlu0 %893
        %v895 = vstv %s222
        %v896 = vmul.f32 %v895, %v890
        %v897 = vmul.f32 %v895, %v892
        %v898 = vmul.f32 %v895, %v894
        %v899 = vadd.f32 %v840, %v896
        %v900 = vadd.f32 %v841, %v897
        %v901 = vadd.f32 %v842, %v898
        %v902 = vstv %s223
        %v903 = vmul.f32 %v902, %v861
        %v904 = vmul.f32 %v902, %v860
        %v905 = vmul.f32 %v902, %v862
        %v906 = vadd.f32 %v853, %v903
        %v907 = vadd.f32 %v854, %v904
        %v908 = vadd.f32 %v855, %v905
        %909 = vrot.lane.b32.xlu0 %v861, 127
        %v910 = vpop.permute.xlu0 %909
        %911 = vrot.lane.b32.xlu0 %v860, 127
        %v912 = vpop.permute.xlu0 %911
        %913 = vrot.lane.b32.xlu0 %v862, 127
        %v914 = vpop.permute.xlu0 %913
        %v915 = vstv %s224
        %v916 = vmul.f32 %v915, %v910
        %v917 = vmul.f32 %v915, %v912
        %v918 = vmul.f32 %v915, %v914
        %v919 = vadd.f32 %v873, %v916
        %v920 = vadd.f32 %v874, %v917
        %v921 = vadd.f32 %v875, %v918
        %922 = vrot.lane.b32.xlu0 %v861, 126
        %v923 = vpop.permute.xlu0 %922
        %924 = vrot.lane.b32.xlu0 %v860, 126
        %v925 = vpop.permute.xlu0 %924
        %926 = vrot.lane.b32.xlu0 %v862, 126
        %v927 = vpop.permute.xlu0 %926
        %v928 = vstv %s225
        %v929 = vmul.f32 %v928, %v923
        %v930 = vmul.f32 %v928, %v925
        %v931 = vmul.f32 %v928, %v927
        %v932 = vadd.f32 %v886, %v929
        %v933 = vadd.f32 %v887, %v930
        %v934 = vadd.f32 %v888, %v931
        %935 = vrot.lane.b32.xlu0 %v861, 125
        %v936 = vpop.permute.xlu0 %935
        %937 = vrot.lane.b32.xlu0 %v860, 125
        %v938 = vpop.permute.xlu0 %937
        %939 = vrot.lane.b32.xlu0 %v862, 125
        %v940 = vpop.permute.xlu0 %939
        %v941 = vstv %s226
        %v942 = vmul.f32 %v941, %v936
        %v943 = vmul.f32 %v941, %v938
        %v944 = vmul.f32 %v941, %v940
        %v945 = vadd.f32 %v899, %v942
        %v946 = vadd.f32 %v900, %v943
        %v947 = vadd.f32 %v901, %v944
        %v948 = vrot.slane %v306, 5
        %v949 = vrot.slane %v307, 5
        %v950 = vrot.slane %v308, 5
        %v951 = vsel %vm314, %v949, %v950
        %v952 = vsel %vm314, %v948, %v949
        %v953 = vsel %vm314, %v950, %v948
        %954 = vrot.lane.b32.xlu0 %v953, 3
        %v955 = vpop.permute.xlu0 %954
        %956 = vrot.lane.b32.xlu0 %v952, 3
        %v957 = vpop.permute.xlu0 %956
        %958 = vrot.lane.b32.xlu0 %v951, 3
        %v959 = vpop.permute.xlu0 %958
        %v960 = vstv %s227
        %v961 = vmul.f32 %v960, %v955
        %v962 = vmul.f32 %v960, %v957
        %v963 = vmul.f32 %v960, %v959
        %v964 = vadd.f32 %v906, %v961
        %v965 = vadd.f32 %v907, %v962
        %v966 = vadd.f32 %v908, %v963
        %967 = vrot.lane.b32.xlu0 %v953, 2
        %v968 = vpop.permute.xlu0 %967
        %969 = vrot.lane.b32.xlu0 %v952, 2
        %v970 = vpop.permute.xlu0 %969
        %971 = vrot.lane.b32.xlu0 %v951, 2
        %v972 = vpop.permute.xlu0 %971
        %v973 = vstv %s228
        %v974 = vmul.f32 %v973, %v968
        %v975 = vmul.f32 %v973, %v970
        %v976 = vmul.f32 %v973, %v972
        %v977 = vadd.f32 %v919, %v974
        %v978 = vadd.f32 %v920, %v975
        %v979 = vadd.f32 %v921, %v976
        %980 = vrot.lane.b32.xlu0 %v953, 1
        %v981 = vpop.permute.xlu0 %980
        %982 = vrot.lane.b32.xlu0 %v952, 1
        %v983 = vpop.permute.xlu0 %982
        %984 = vrot.lane.b32.xlu0 %v951, 1
        %v985 = vpop.permute.xlu0 %984
        %v986 = vstv %s229
        %v987 = vmul.f32 %v986, %v981
        %v988 = vmul.f32 %v986, %v983
        %v989 = vmul.f32 %v986, %v985
        %v990 = vadd.f32 %v932, %v987
        %v991 = vadd.f32 %v933, %v988
        %v992 = vadd.f32 %v934, %v989
        %v993 = vstv %s230
        %v994 = vmul.f32 %v993, %v953
        %v995 = vmul.f32 %v993, %v952
        %v996 = vmul.f32 %v993, %v951
        %v997 = vadd.f32 %v945, %v994
        %v998 = vadd.f32 %v946, %v995
        %v999 = vadd.f32 %v947, %v996
        %1000 = vrot.lane.b32.xlu0 %v953, 127
        %v1001 = vpop.permute.xlu0 %1000
        %1002 = vrot.lane.b32.xlu0 %v952, 127
        %v1003 = vpop.permute.xlu0 %1002
        %1004 = vrot.lane.b32.xlu0 %v951, 127
        %v1005 = vpop.permute.xlu0 %1004
        %v1006 = vstv %s231
        %v1007 = vmul.f32 %v1006, %v1001
        %v1008 = vmul.f32 %v1006, %v1003
        %v1009 = vmul.f32 %v1006, %v1005
        %v1010 = vadd.f32 %v964, %v1007
        %v1011 = vadd.f32 %v965, %v1008
        %v1012 = vadd.f32 %v966, %v1009
        %1013 = vrot.lane.b32.xlu0 %v953, 126
        %v1014 = vpop.permute.xlu0 %1013
        %1015 = vrot.lane.b32.xlu0 %v952, 126
        %v1016 = vpop.permute.xlu0 %1015
        %1017 = vrot.lane.b32.xlu0 %v951, 126
        %v1018 = vpop.permute.xlu0 %1017
        %v1019 = vstv %s232
        %v1020 = vmul.f32 %v1019, %v1014
        %v1021 = vmul.f32 %v1019, %v1016
        %v1022 = vmul.f32 %v1019, %v1018
        %v1023 = vadd.f32 %v977, %v1020
        %v1024 = vadd.f32 %v978, %v1021
        %v1025 = vadd.f32 %v979, %v1022
        %1026 = vrot.lane.b32.xlu0 %v953, 125
        %v1027 = vpop.permute.xlu0 %1026
        %1028 = vrot.lane.b32.xlu0 %v952, 125
        %v1029 = vpop.permute.xlu0 %1028
        %1030 = vrot.lane.b32.xlu0 %v951, 125
        %v1031 = vpop.permute.xlu0 %1030
        %v1032 = vstv %s233
        %v1033 = vmul.f32 %v1032, %v1027
        %v1034 = vmul.f32 %v1032, %v1029
        %v1035 = vmul.f32 %v1032, %v1031
        %v1036 = vadd.f32 %v990, %v1033
        %v1037 = vadd.f32 %v991, %v1034
        %v1038 = vadd.f32 %v992, %v1035
        %v1039 = vrot.slane %v306, 6
        %v1040 = vrot.slane %v307, 6
        %v1041 = vrot.slane %v308, 6
        %v1042 = vsel %vm406, %v1040, %v1041
        %v1043 = vsel %vm406, %v1039, %v1040
        %v1044 = vsel %vm406, %v1041, %v1039
        %1045 = vrot.lane.b32.xlu0 %v1044, 3
        %v1046 = vpop.permute.xlu0 %1045
        %1047 = vrot.lane.b32.xlu0 %v1043, 3
        %v1048 = vpop.permute.xlu0 %1047
        %1049 = vrot.lane.b32.xlu0 %v1042, 3
        %v1050 = vpop.permute.xlu0 %1049
        %v1051 = vstv %s234
        %v1052 = vmul.f32 %v1051, %v1046
        %v1053 = vmul.f32 %v1051, %v1048
        %v1054 = vmul.f32 %v1051, %v1050
        %v1055 = vadd.f32 %v997, %v1052
        %v1056 = vadd.f32 %v998, %v1053
        %v1057 = vadd.f32 %v999, %v1054
        %1058 = vrot.lane.b32.xlu0 %v1044, 2
        %v1059 = vpop.permute.xlu0 %1058
        %1060 = vrot.lane.b32.xlu0 %v1043, 2
        %v1061 = vpop.permute.xlu0 %1060
        %1062 = vrot.lane.b32.xlu0 %v1042, 2
        %v1063 = vpop.permute.xlu0 %1062
        %v1064 = vstv %s235
        %v1065 = vmul.f32 %v1064, %v1059
        %v1066 = vmul.f32 %v1064, %v1061
        %v1067 = vmul.f32 %v1064, %v1063
        %v1068 = vadd.f32 %v1010, %v1065
        %v1069 = vadd.f32 %v1011, %v1066
        %v1070 = vadd.f32 %v1012, %v1067
        %1071 = vrot.lane.b32.xlu0 %v1044, 1
        %v1072 = vpop.permute.xlu0 %1071
        %1073 = vrot.lane.b32.xlu0 %v1043, 1
        %v1074 = vpop.permute.xlu0 %1073
        %1075 = vrot.lane.b32.xlu0 %v1042, 1
        %v1076 = vpop.permute.xlu0 %1075
        %v1077 = vstv %s236
        %v1078 = vmul.f32 %v1077, %v1072
        %v1079 = vmul.f32 %v1077, %v1074
        %v1080 = vmul.f32 %v1077, %v1076
        %v1081 = vadd.f32 %v1023, %v1078
        %v1082 = vadd.f32 %v1024, %v1079
        %v1083 = vadd.f32 %v1025, %v1080
        %v1084 = vstv %s237
        %v1085 = vmul.f32 %v1084, %v1044
        %v1086 = vmul.f32 %v1084, %v1043
        %v1087 = vmul.f32 %v1084, %v1042
        %v1088 = vadd.f32 %v1036, %v1085
        %v1089 = vadd.f32 %v1037, %v1086
        %v1090 = vadd.f32 %v1038, %v1087
        %1091 = vrot.lane.b32.xlu0 %v1044, 127
        %v1092 = vpop.permute.xlu0 %1091
        %1093 = vrot.lane.b32.xlu0 %v1043, 127
        %v1094 = vpop.permute.xlu0 %1093
        %1095 = vrot.lane.b32.xlu0 %v1042, 127
        %v1096 = vpop.permute.xlu0 %1095
        %v1097 = vstv %s238
        %v1098 = vmul.f32 %v1097, %v1092
        %v1099 = vmul.f32 %v1097, %v1094
        %v1100 = vmul.f32 %v1097, %v1096
        %v1101 = vadd.f32 %v1055, %v1098
        %v1102 = vadd.f32 %v1056, %v1099
        %v1103 = vadd.f32 %v1057, %v1100
        %1104 = vrot.lane.b32.xlu0 %v1044, 126
        %v1105 = vpop.permute.xlu0 %1104
        %1106 = vrot.lane.b32.xlu0 %v1043, 126
        %v1107 = vpop.permute.xlu0 %1106
        %1108 = vrot.lane.b32.xlu0 %v1042, 126
        %v1109 = vpop.permute.xlu0 %1108
        %v1110 = vstv %s239
        %v1111 = vmul.f32 %v1110, %v1105
        %v1112 = vmul.f32 %v1110, %v1107
        %v1113 = vmul.f32 %v1110, %v1109
        %v1114 = vadd.f32 %v1068, %v1111
        %v1115 = vadd.f32 %v1069, %v1112
        %v1116 = vadd.f32 %v1070, %v1113
        %1117 = vrot.lane.b32.xlu0 %v1044, 125
        %v1118 = vpop.permute.xlu0 %1117
        %1119 = vrot.lane.b32.xlu0 %v1043, 125
        %v1120 = vpop.permute.xlu0 %1119
        %1121 = vrot.lane.b32.xlu0 %v1042, 125
        %v1122 = vpop.permute.xlu0 %1121
        %v1123 = vstv %s240
        %v1124 = vmul.f32 %v1123, %v1118
        %v1125 = vmul.f32 %v1123, %v1120
        %v1126 = vmul.f32 %v1123, %v1122
        %v1127 = vadd.f32 %v1081, %v1124
        %v1128 = vadd.f32 %v1082, %v1125
        %v1129 = vadd.f32 %v1083, %v1126
        %v1130 = vrot.slane %v306, 7
        %v1131 = vrot.slane %v307, 7
        %v1132 = vrot.slane %v308, 7
        %v1133 = vsel %vm498, %v1131, %v1132
        %v1134 = vsel %vm498, %v1130, %v1131
        %v1135 = vsel %vm498, %v1132, %v1130
        %1136 = vrot.lane.b32.xlu0 %v1135, 3
        %v1137 = vpop.permute.xlu0 %1136
        %1138 = vrot.lane.b32.xlu0 %v1134, 3
        %v1139 = vpop.permute.xlu0 %1138
        %1140 = vrot.lane.b32.xlu0 %v1133, 3
        %v1141 = vpop.permute.xlu0 %1140
        %v1142 = vstv %s241
        %v1143 = vmul.f32 %v1142, %v1137
        %v1144 = vmul.f32 %v1142, %v1139
        %v1145 = vmul.f32 %v1142, %v1141
        %v1146 = vadd.f32 %v1088, %v1143
        %v1147 = vadd.f32 %v1089, %v1144
        %v1148 = vadd.f32 %v1090, %v1145
        %1149 = vrot.lane.b32.xlu0 %v1135, 2
        %v1150 = vpop.permute.xlu0 %1149
        %1151 = vrot.lane.b32.xlu0 %v1134, 2
        %v1152 = vpop.permute.xlu0 %1151
        %1153 = vrot.lane.b32.xlu0 %v1133, 2
        %v1154 = vpop.permute.xlu0 %1153
        %v1155 = vstv %s242
        %v1156 = vmul.f32 %v1155, %v1150
        %v1157 = vmul.f32 %v1155, %v1152
        %v1158 = vmul.f32 %v1155, %v1154
        %v1159 = vadd.f32 %v1101, %v1156
        %v1160 = vadd.f32 %v1102, %v1157
        %v1161 = vadd.f32 %v1103, %v1158
        %1162 = vrot.lane.b32.xlu0 %v1135, 1
        %v1163 = vpop.permute.xlu0 %1162
        %1164 = vrot.lane.b32.xlu0 %v1134, 1
        %v1165 = vpop.permute.xlu0 %1164
        %1166 = vrot.lane.b32.xlu0 %v1133, 1
        %v1167 = vpop.permute.xlu0 %1166
        %v1168 = vstv %s243
        %v1169 = vmul.f32 %v1168, %v1163
        %v1170 = vmul.f32 %v1168, %v1165
        %v1171 = vmul.f32 %v1168, %v1167
        %v1172 = vadd.f32 %v1114, %v1169
        %v1173 = vadd.f32 %v1115, %v1170
        %v1174 = vadd.f32 %v1116, %v1171
        %v1175 = vstv %s244
        %v1176 = vmul.f32 %v1175, %v1135
        %v1177 = vmul.f32 %v1175, %v1134
        %v1178 = vmul.f32 %v1175, %v1133
        %v1179 = vadd.f32 %v1127, %v1176
        %v1180 = vadd.f32 %v1128, %v1177
        %v1181 = vadd.f32 %v1129, %v1178
        %1182 = vrot.lane.b32.xlu0 %v1135, 127
        %v1183 = vpop.permute.xlu0 %1182
        %1184 = vrot.lane.b32.xlu0 %v1134, 127
        %v1185 = vpop.permute.xlu0 %1184
        %1186 = vrot.lane.b32.xlu0 %v1133, 127
        %v1187 = vpop.permute.xlu0 %1186
        %v1188 = vstv %s245
        %v1189 = vmul.f32 %v1188, %v1183
        %v1190 = vmul.f32 %v1188, %v1185
        %v1191 = vmul.f32 %v1188, %v1187
        %v1192 = vadd.f32 %v1146, %v1189
        %v1193 = vadd.f32 %v1147, %v1190
        %v1194 = vadd.f32 %v1148, %v1191
        %1195 = vrot.lane.b32.xlu0 %v1135, 126
        %v1196 = vpop.permute.xlu0 %1195
        %1197 = vrot.lane.b32.xlu0 %v1134, 126
        %v1198 = vpop.permute.xlu0 %1197
        %1199 = vrot.lane.b32.xlu0 %v1133, 126
        %v1200 = vpop.permute.xlu0 %1199
        %v1201 = vstv %s246
        %v1202 = vmul.f32 %v1201, %v1196
        %v1203 = vmul.f32 %v1201, %v1198
        %v1204 = vmul.f32 %v1201, %v1200
        %v1205 = vadd.f32 %v1159, %v1202
        %v1206 = vadd.f32 %v1160, %v1203
        %v1207 = vadd.f32 %v1161, %v1204
        %1208 = vrot.lane.b32.xlu0 %v1135, 125
        %v1209 = vpop.permute.xlu0 %1208
        %1210 = vrot.lane.b32.xlu0 %v1134, 125
        %v1211 = vpop.permute.xlu0 %1210
        %1212 = vrot.lane.b32.xlu0 %v1133, 125
        %v1213 = vpop.permute.xlu0 %1212
        %v1214 = vstv %s247
        %v1215 = vmul.f32 %v1214, %v1209
        %v1216 = vmul.f32 %v1214, %v1211
        %v1217 = vmul.f32 %v1214, %v1213
        %v1218 = vadd.f32 %v1172, %v1215
        %v1219 = vadd.f32 %v1173, %v1216
        %v1220 = vadd.f32 %v1174, %v1217
        %1221 = vrot.lane.b32.xlu0 %v306, 3
        %v1222 = vpop.permute.xlu0 %1221
        %1223 = vrot.lane.b32.xlu0 %v307, 3
        %v1224 = vpop.permute.xlu0 %1223
        %1225 = vrot.lane.b32.xlu0 %v308, 3
        %v1226 = vpop.permute.xlu0 %1225
        %v1227 = vstv %s248
        %v1228 = vmul.f32 %v1227, %v1222
        %v1229 = vmul.f32 %v1227, %v1224
        %v1230 = vmul.f32 %v1227, %v1226
        %v1231 = vadd.f32 %v1179, %v1228
        %v1232 = vadd.f32 %v1180, %v1229
        %v1233 = vadd.f32 %v1181, %v1230
        %1234 = vrot.lane.b32.xlu0 %v306, 2
        %v1235 = vpop.permute.xlu0 %1234
        %1236 = vrot.lane.b32.xlu0 %v307, 2
        %v1237 = vpop.permute.xlu0 %1236
        %1238 = vrot.lane.b32.xlu0 %v308, 2
        %v1239 = vpop.permute.xlu0 %1238
        %v1240 = vstv %s249
        %v1241 = vmul.f32 %v1240, %v1235
        %v1242 = vmul.f32 %v1240, %v1237
        %v1243 = vmul.f32 %v1240, %v1239
        %v1244 = vadd.f32 %v1192, %v1241
        %v1245 = vadd.f32 %v1193, %v1242
        %v1246 = vadd.f32 %v1194, %v1243
        %1247 = vrot.lane.b32.xlu0 %v306, 1
        %v1248 = vpop.permute.xlu0 %1247
        %1249 = vrot.lane.b32.xlu0 %v307, 1
        %v1250 = vpop.permute.xlu0 %1249
        %1251 = vrot.lane.b32.xlu0 %v308, 1
        %v1252 = vpop.permute.xlu0 %1251
        %v1253 = vstv %s250
        %v1254 = vmul.f32 %v1253, %v1248
        %v1255 = vmul.f32 %v1253, %v1250
        %v1256 = vmul.f32 %v1253, %v1252
        %v1257 = vadd.f32 %v1205, %v1254
        %v1258 = vadd.f32 %v1206, %v1255
        %v1259 = vadd.f32 %v1207, %v1256
        %v1260 = vstv %s251
        %v1261 = vmul.f32 %v1260, %v306
        %v1262 = vmul.f32 %v1260, %v307
        %v1263 = vmul.f32 %v1260, %v308
        %v1264 = vadd.f32 %v1218, %v1261
        %v1265 = vadd.f32 %v1219, %v1262
        %v1266 = vadd.f32 %v1220, %v1263
        %1267 = vrot.lane.b32.xlu0 %v306, 127
        %v1268 = vpop.permute.xlu0 %1267
        %1269 = vrot.lane.b32.xlu0 %v307, 127
        %v1270 = vpop.permute.xlu0 %1269
        %1271 = vrot.lane.b32.xlu0 %v308, 127
        %v1272 = vpop.permute.xlu0 %1271
        %v1273 = vstv %s252
        %v1274 = vmul.f32 %v1273, %v1268
        %v1275 = vmul.f32 %v1273, %v1270
        %v1276 = vmul.f32 %v1273, %v1272
        %v1277 = vadd.f32 %v1231, %v1274
        %v1278 = vadd.f32 %v1232, %v1275
        %v1279 = vadd.f32 %v1233, %v1276
        %1280 = vrot.lane.b32.xlu0 %v306, 126
        %v1281 = vpop.permute.xlu0 %1280
        %1282 = vrot.lane.b32.xlu0 %v307, 126
        %v1283 = vpop.permute.xlu0 %1282
        %1284 = vrot.lane.b32.xlu0 %v308, 126
        %v1285 = vpop.permute.xlu0 %1284
        %v1286 = vstv %s253
        %v1287 = vmul.f32 %v1286, %v1281
        %v1288 = vmul.f32 %v1286, %v1283
        %v1289 = vmul.f32 %v1286, %v1285
        %v1290 = vadd.f32 %v1244, %v1287
        %v1291 = vadd.f32 %v1245, %v1288
        %v1292 = vadd.f32 %v1246, %v1289
        %1293 = vrot.lane.b32.xlu0 %v306, 125
        %v1294 = vpop.permute.xlu0 %1293
        %1295 = vrot.lane.b32.xlu0 %v307, 125
        %v1296 = vpop.permute.xlu0 %1295
        %1297 = vrot.lane.b32.xlu0 %v308, 125
        %v1298 = vpop.permute.xlu0 %1297
        %v1299 = vstv %s254
        %v1300 = vmul.f32 %v1299, %v1294
        %v1301 = vmul.f32 %v1299, %v1296
        %v1302 = vmul.f32 %v1299, %v1298
        %v1303 = vadd.f32 %v1257, %v1300
        %v1304 = vadd.f32 %v1258, %v1301
        %v1305 = vadd.f32 %v1259, %v1302
        %v1306 = vrot.slane %v306, 1
        %v1307 = vrot.slane %v307, 1
        %v1308 = vrot.slane %v308, 1
        %v1309 = vsel %vm675, %v1307, %v1308
        %v1310 = vsel %vm675, %v1306, %v1307
        %v1311 = vsel %vm675, %v1308, %v1306
        %1312 = vrot.lane.b32.xlu0 %v1310, 3
        %v1313 = vpop.permute.xlu0 %1312
        %1314 = vrot.lane.b32.xlu0 %v1309, 3
        %v1315 = vpop.permute.xlu0 %1314
        %1316 = vrot.lane.b32.xlu0 %v1311, 3
        %v1317 = vpop.permute.xlu0 %1316
        %v1318 = vstv %s255
        %v1319 = vmul.f32 %v1318, %v1313
        %v1320 = vmul.f32 %v1318, %v1315
        %v1321 = vmul.f32 %v1318, %v1317
        %v1322 = vadd.f32 %v1264, %v1319
        %v1323 = vadd.f32 %v1265, %v1320
        %v1324 = vadd.f32 %v1266, %v1321
        %1325 = vrot.lane.b32.xlu0 %v1310, 2
        %v1326 = vpop.permute.xlu0 %1325
        %1327 = vrot.lane.b32.xlu0 %v1309, 2
        %v1328 = vpop.permute.xlu0 %1327
        %1329 = vrot.lane.b32.xlu0 %v1311, 2
        %v1330 = vpop.permute.xlu0 %1329
        %v1331 = vstv %s256
        %v1332 = vmul.f32 %v1331, %v1326
        %v1333 = vmul.f32 %v1331, %v1328
        %v1334 = vmul.f32 %v1331, %v1330
        %v1335 = vadd.f32 %v1277, %v1332
        %v1336 = vadd.f32 %v1278, %v1333
        %v1337 = vadd.f32 %v1279, %v1334
        %1338 = vrot.lane.b32.xlu0 %v1310, 1
        %v1339 = vpop.permute.xlu0 %1338
        %1340 = vrot.lane.b32.xlu0 %v1309, 1
        %v1341 = vpop.permute.xlu0 %1340
        %1342 = vrot.lane.b32.xlu0 %v1311, 1
        %v1343 = vpop.permute.xlu0 %1342
        %v1344 = vstv %s257
        %v1345 = vmul.f32 %v1344, %v1339
        %v1346 = vmul.f32 %v1344, %v1341
        %v1347 = vmul.f32 %v1344, %v1343
        %v1348 = vadd.f32 %v1290, %v1345
        %v1349 = vadd.f32 %v1291, %v1346
        %v1350 = vadd.f32 %v1292, %v1347
        %v1351 = vstv %s258
        %v1352 = vmul.f32 %v1351, %v1310
        %v1353 = vmul.f32 %v1351, %v1309
        %v1354 = vmul.f32 %v1351, %v1311
        %v1355 = vadd.f32 %v1303, %v1352
        %v1356 = vadd.f32 %v1304, %v1353
        %v1357 = vadd.f32 %v1305, %v1354
        %1358 = vrot.lane.b32.xlu0 %v1310, 127
        %v1359 = vpop.permute.xlu0 %1358
        %1360 = vrot.lane.b32.xlu0 %v1309, 127
        %v1361 = vpop.permute.xlu0 %1360
        %1362 = vrot.lane.b32.xlu0 %v1311, 127
        %v1363 = vpop.permute.xlu0 %1362
        %v1364 = vstv %s259
        %v1365 = vmul.f32 %v1364, %v1359
        %v1366 = vmul.f32 %v1364, %v1361
        %v1367 = vmul.f32 %v1364, %v1363
        %v1368 = vadd.f32 %v1322, %v1365
        %v1369 = vadd.f32 %v1323, %v1366
        %v1370 = vadd.f32 %v1324, %v1367
        %1371 = vrot.lane.b32.xlu0 %v1310, 126
        %v1372 = vpop.permute.xlu0 %1371
        %1373 = vrot.lane.b32.xlu0 %v1309, 126
        %v1374 = vpop.permute.xlu0 %1373
        %1375 = vrot.lane.b32.xlu0 %v1311, 126
        %v1376 = vpop.permute.xlu0 %1375
        %v1377 = vstv %s260
        %v1378 = vmul.f32 %v1377, %v1372
        %v1379 = vmul.f32 %v1377, %v1374
        %v1380 = vmul.f32 %v1377, %v1376
        %v1381 = vadd.f32 %v1335, %v1378
        %v1382 = vadd.f32 %v1336, %v1379
        %v1383 = vadd.f32 %v1337, %v1380
        %1384 = vrot.lane.b32.xlu0 %v1310, 125
        %v1385 = vpop.permute.xlu0 %1384
        %1386 = vrot.lane.b32.xlu0 %v1309, 125
        %v1387 = vpop.permute.xlu0 %1386
        %1388 = vrot.lane.b32.xlu0 %v1311, 125
        %v1389 = vpop.permute.xlu0 %1388
        %v1390 = vstv %s261
        %v1391 = vmul.f32 %v1390, %v1385
        %v1392 = vmul.f32 %v1390, %v1387
        %v1393 = vmul.f32 %v1390, %v1389
        %v1394 = vadd.f32 %v1348, %v1391
        %v1395 = vadd.f32 %v1349, %v1392
        %v1396 = vadd.f32 %v1350, %v1393
        %v1397 = vrot.slane %v306, 2
        %v1398 = vrot.slane %v307, 2
        %v1399 = vrot.slane %v308, 2
        %v1400 = vsel %vm767, %v1398, %v1399
        %v1401 = vsel %vm767, %v1397, %v1398
        %v1402 = vsel %vm767, %v1399, %v1397
        %1403 = vrot.lane.b32.xlu0 %v1401, 3
        %v1404 = vpop.permute.xlu0 %1403
        %1405 = vrot.lane.b32.xlu0 %v1400, 3
        %v1406 = vpop.permute.xlu0 %1405
        %1407 = vrot.lane.b32.xlu0 %v1402, 3
        %v1408 = vpop.permute.xlu0 %1407
        %v1409 = vstv %s262
        %v1410 = vmul.f32 %v1409, %v1404
        %v1411 = vmul.f32 %v1409, %v1406
        %v1412 = vmul.f32 %v1409, %v1408
        %v1413 = vadd.f32 %v1355, %v1410
        %v1414 = vadd.f32 %v1356, %v1411
        %v1415 = vadd.f32 %v1357, %v1412
        %1416 = vrot.lane.b32.xlu0 %v1401, 2
        %v1417 = vpop.permute.xlu0 %1416
        %1418 = vrot.lane.b32.xlu0 %v1400, 2
        %v1419 = vpop.permute.xlu0 %1418
        %1420 = vrot.lane.b32.xlu0 %v1402, 2
        %v1421 = vpop.permute.xlu0 %1420
        %v1422 = vstv %s263
        %v1423 = vmul.f32 %v1422, %v1417
        %v1424 = vmul.f32 %v1422, %v1419
        %v1425 = vmul.f32 %v1422, %v1421
        %v1426 = vadd.f32 %v1368, %v1423
        %v1427 = vadd.f32 %v1369, %v1424
        %v1428 = vadd.f32 %v1370, %v1425
        %1429 = vrot.lane.b32.xlu0 %v1401, 1
        %v1430 = vpop.permute.xlu0 %1429
        %1431 = vrot.lane.b32.xlu0 %v1400, 1
        %v1432 = vpop.permute.xlu0 %1431
        %1433 = vrot.lane.b32.xlu0 %v1402, 1
        %v1434 = vpop.permute.xlu0 %1433
        %v1435 = vstv %s264
        %v1436 = vmul.f32 %v1435, %v1430
        %v1437 = vmul.f32 %v1435, %v1432
        %v1438 = vmul.f32 %v1435, %v1434
        %v1439 = vadd.f32 %v1381, %v1436
        %v1440 = vadd.f32 %v1382, %v1437
        %v1441 = vadd.f32 %v1383, %v1438
        %v1442 = vstv %s265
        %v1443 = vmul.f32 %v1442, %v1401
        %v1444 = vmul.f32 %v1442, %v1400
        %v1445 = vmul.f32 %v1442, %v1402
        %v1446 = vadd.f32 %v1394, %v1443
        %v1447 = vadd.f32 %v1395, %v1444
        %v1448 = vadd.f32 %v1396, %v1445
        %1449 = vrot.lane.b32.xlu0 %v1401, 127
        %v1450 = vpop.permute.xlu0 %1449
        %1451 = vrot.lane.b32.xlu0 %v1400, 127
        %v1452 = vpop.permute.xlu0 %1451
        %1453 = vrot.lane.b32.xlu0 %v1402, 127
        %v1454 = vpop.permute.xlu0 %1453
        %v1455 = vstv %s266
        %v1456 = vmul.f32 %v1455, %v1450
        %v1457 = vmul.f32 %v1455, %v1452
        %v1458 = vmul.f32 %v1455, %v1454
        %v1459 = vadd.f32 %v1413, %v1456
        %v1460 = vadd.f32 %v1414, %v1457
        %v1461 = vadd.f32 %v1415, %v1458
        %1462 = vrot.lane.b32.xlu0 %v1401, 126
        %v1463 = vpop.permute.xlu0 %1462
        %1464 = vrot.lane.b32.xlu0 %v1400, 126
        %v1465 = vpop.permute.xlu0 %1464
        %1466 = vrot.lane.b32.xlu0 %v1402, 126
        %v1467 = vpop.permute.xlu0 %1466
        %v1468 = vstv %s267
        %v1469 = vmul.f32 %v1468, %v1463
        %v1470 = vmul.f32 %v1468, %v1465
        %v1471 = vmul.f32 %v1468, %v1467
        %v1472 = vadd.f32 %v1426, %v1469
        %v1473 = vadd.f32 %v1427, %v1470
        %v1474 = vadd.f32 %v1428, %v1471
        %1475 = vrot.lane.b32.xlu0 %v1401, 125
        %v1476 = vpop.permute.xlu0 %1475
        %1477 = vrot.lane.b32.xlu0 %v1400, 125
        %v1478 = vpop.permute.xlu0 %1477
        %1479 = vrot.lane.b32.xlu0 %v1402, 125
        %v1480 = vpop.permute.xlu0 %1479
        %v1481 = vstv %s268
        %v1482 = vmul.f32 %v1481, %v1476
        %v1483 = vmul.f32 %v1481, %v1478
        %v1484 = vmul.f32 %v1481, %v1480
        %v1485 = vadd.f32 %v1439, %v1482
        %v1486 = vadd.f32 %v1440, %v1483
        %v1487 = vadd.f32 %v1441, %v1484
        %v1488 = vrot.slane %v306, 3
        %v1489 = vrot.slane %v307, 3
        %v1490 = vrot.slane %v308, 3
        %v1491 = vsel %vm859, %v1489, %v1490
        %v1492 = vsel %vm859, %v1488, %v1489
        %v1493 = vsel %vm859, %v1490, %v1488
        %1494 = vrot.lane.b32.xlu0 %v1492, 3
        %v1495 = vpop.permute.xlu0 %1494
        %1496 = vrot.lane.b32.xlu0 %v1491, 3
        %v1497 = vpop.permute.xlu0 %1496
        %1498 = vrot.lane.b32.xlu0 %v1493, 3
        %v1499 = vpop.permute.xlu0 %1498
        %v1500 = vstv %s269
        %v1501 = vmul.f32 %v1500, %v1495
        %v1502 = vmul.f32 %v1500, %v1497
        %v1503 = vmul.f32 %v1500, %v1499
        %v1504 = vadd.f32 %v1446, %v1501
        %v1505 = vadd.f32 %v1447, %v1502
        %v1506 = vadd.f32 %v1448, %v1503
        %1507 = vrot.lane.b32.xlu0 %v1492, 2
        %v1508 = vpop.permute.xlu0 %1507
        %1509 = vrot.lane.b32.xlu0 %v1491, 2
        %v1510 = vpop.permute.xlu0 %1509
        %1511 = vrot.lane.b32.xlu0 %v1493, 2
        %v1512 = vpop.permute.xlu0 %1511
        %v1513 = vstv %s270
        %v1514 = vmul.f32 %v1513, %v1508
        %v1515 = vmul.f32 %v1513, %v1510
        %v1516 = vmul.f32 %v1513, %v1512
        %v1517 = vadd.f32 %v1459, %v1514
        %v1518 = vadd.f32 %v1460, %v1515
        %v1519 = vadd.f32 %v1461, %v1516
        %1520 = vrot.lane.b32.xlu0 %v1492, 1
        %v1521 = vpop.permute.xlu0 %1520
        %1522 = vrot.lane.b32.xlu0 %v1491, 1
        %v1523 = vpop.permute.xlu0 %1522
        %1524 = vrot.lane.b32.xlu0 %v1493, 1
        %v1525 = vpop.permute.xlu0 %1524
        %v1526 = vstv %s271
        %v1527 = vmul.f32 %v1526, %v1521
        %v1528 = vmul.f32 %v1526, %v1523
        %v1529 = vmul.f32 %v1526, %v1525
        %v1530 = vadd.f32 %v1472, %v1527
        %v1531 = vadd.f32 %v1473, %v1528
        %v1532 = vadd.f32 %v1474, %v1529
        %v1533 = vstv %s272
        %v1534 = vmul.f32 %v1533, %v1492
        %v1535 = vmul.f32 %v1533, %v1491
        %v1536 = vmul.f32 %v1533, %v1493
        %v1537 = vadd.f32 %v1485, %v1534
        %v1538 = vadd.f32 %v1486, %v1535
        %v1539 = vadd.f32 %v1487, %v1536
        %1540 = vrot.lane.b32.xlu0 %v1492, 127
        %v1541 = vpop.permute.xlu0 %1540
        %1542 = vrot.lane.b32.xlu0 %v1491, 127
        %v1543 = vpop.permute.xlu0 %1542
        %1544 = vrot.lane.b32.xlu0 %v1493, 127
        %v1545 = vpop.permute.xlu0 %1544
        %v1546 = vstv %s273
        %v1547 = vmul.f32 %v1546, %v1541
        %v1548 = vmul.f32 %v1546, %v1543
        %v1549 = vmul.f32 %v1546, %v1545
        %v1550 = vadd.f32 %v1504, %v1547
        %v1551 = vadd.f32 %v1505, %v1548
        %v1552 = vadd.f32 %v1506, %v1549
        %1553 = vrot.lane.b32.xlu0 %v1492, 126
        %v1554 = vpop.permute.xlu0 %1553
        %1555 = vrot.lane.b32.xlu0 %v1491, 126
        %v1556 = vpop.permute.xlu0 %1555
        %1557 = vrot.lane.b32.xlu0 %v1493, 126
        %v1558 = vpop.permute.xlu0 %1557
        %v1559 = vstv %s274
        %v1560 = vmul.f32 %v1559, %v1554
        %v1561 = vmul.f32 %v1559, %v1556
        %v1562 = vmul.f32 %v1559, %v1558
        %v1563 = vadd.f32 %v1517, %v1560
        %v1564 = vadd.f32 %v1518, %v1561
        %v1565 = vadd.f32 %v1519, %v1562
        %1566 = vrot.lane.b32.xlu0 %v1492, 125
        %v1567 = vpop.permute.xlu0 %1566
        %1568 = vrot.lane.b32.xlu0 %v1491, 125
        %v1569 = vpop.permute.xlu0 %1568
        %1570 = vrot.lane.b32.xlu0 %v1493, 125
        %v1571 = vpop.permute.xlu0 %1570
        %v1572 = vstv %s275
        %v1573 = vmul.f32 %v1572, %v1567
        %v1574 = vmul.f32 %v1572, %v1569
        %v1575 = vmul.f32 %v1572, %v1571
        %v1576 = vadd.f32 %v1530, %v1573
        %v1577 = vadd.f32 %v1531, %v1574
        %v1578 = vadd.f32 %v1532, %v1575
        %v1579 = vadd.f32 %v1563, %v1576
        %v1580 = vadd.f32 %v1564, %v1577
        %v1581 = vadd.f32 %v1565, %v1578
        %v1582 = vadd.f32 %v1537, %v1550
        %v1583 = vadd.f32 %v1538, %v1551
        %v1584 = vadd.f32 %v1539, %v1552
        %v1585 = vadd.f32 %v1579, %v1582
        %v1586 = vadd.f32 %v1580, %v1583
        %v1587 = vadd.f32 %v1581, %v1584
        %v1588 = vxor.u32 %v1585, 2147483648
        %v1589 = vxor.u32 %v1586, 2147483648
        %v1590 = vxor.u32 %v1587, 2147483648
        %v1591 = vmul.f32 %v1588, 1.442695
        %v1592 = vpow.pop %v1591
        %v1593 = vmul.f32 %v1589, 1.442695
        %v1594 = vpow.pop %v1593
        %v1595 = vmul.f32 %v1590, 1.442695
        %v1596 = vpow.pop %v1595
        %v1597 = vadd.f32 %v1592, 1.0
        %v1598 = vadd.f32 %v1594, 1.0
        %v1599 = vadd.f32 %v1596, 1.0
        %v1600 = vrcp.pop %v1597
        %v1601 = vmul.f32 %v1597, %v1600
        %v1602 = vsub.f32 1.0, %v1601
        %v1603 = vmul.f32 %v1600, %v1602
        %v1604 = vadd.f32 %v1600, %v1603
        %vm1605 = vweird.f32 %v1597
        %vm1606 = vweird.f32 %v1600
        %vm1607 = vmor %vm1605, %vm1606
        %v1608 = vsel %vm1607, %v1600, %v1604
        %v1609 = vand.u32 2147483647, %v1597
        %vm1610 = vcmp.eq.f32.partialorder %v1609, 8.507059e+37
        %v1611 = vand.u32 %v1597, 2147483648
        %v1612 = vor.u32 1.1754944e-38, %v1611
        %v1613 = vsel %vm1610, %v1612, %v1608
        %v1614 = vmul.f32 1.0, %v1613
        %v1615 = vrcp.pop %v1598
        %v1616 = vmul.f32 %v1598, %v1615
        %v1617 = vsub.f32 1.0, %v1616
        %v1618 = vmul.f32 %v1615, %v1617
        %v1619 = vadd.f32 %v1615, %v1618
        %vm1620 = vweird.f32 %v1598
        %vm1621 = vweird.f32 %v1615
        %vm1622 = vmor %vm1620, %vm1621
        %v1623 = vsel %vm1622, %v1615, %v1619
        %v1624 = vand.u32 2147483647, %v1598
        %vm1625 = vcmp.eq.f32.partialorder %v1624, 8.507059e+37
        %v1626 = vand.u32 %v1598, 2147483648
        %v1627 = vor.u32 1.1754944e-38, %v1626
        %v1628 = vsel %vm1625, %v1627, %v1623
        %v1629 = vmul.f32 1.0, %v1628
        %v1630 = vrcp.pop %v1599
        %v1631 = vmul.f32 %v1599, %v1630
        %v1632 = vsub.f32 1.0, %v1631
        %v1633 = vmul.f32 %v1630, %v1632
        %v1634 = vadd.f32 %v1630, %v1633
        %vm1635 = vweird.f32 %v1599
        %vm1636 = vweird.f32 %v1630
        %vm1637 = vmor %vm1635, %vm1636
        %v1638 = vsel %vm1637, %v1630, %v1634
        %v1639 = vand.u32 2147483647, %v1599
        %vm1640 = vcmp.eq.f32.partialorder %v1639, 8.507059e+37
        %v1641 = vand.u32 %v1599, 2147483648
        %v1642 = vor.u32 1.1754944e-38, %v1641
        %v1643 = vsel %vm1640, %v1642, %v1638
        %v1644 = vmul.f32 1.0, %v1643
        %1645 = vst [vmem:[%s177] sm:$0xff] %v1614
        %1646 = vst [vmem:[%s177 + $0x8] sm:$0xff] %v1629
        %1647 = vst [vmem:[%s177 + $0x10] sm:$0xff] %v1644
        %s1648 = sand.u32 %s75, 1
        %s1649 = scalar_lea.sflag [#allocation4], %s1648
        %s1650 = sand.u32 %s75, 1
        %s1651 = smul.addr %s1650, 24
        %s1652 = scalar_lea.vmem [#allocation7], %s1651
        // Predicated region
        $region37: #{tpu_custom_call.1} parent=27 // pred_check
          %p1653 = pneg %p85
        $region38: #{tpu_custom_call.1} parent=27 // pred_check_branch
          %1655 = sbr.rel (%p1653) target = $region40
        $region39: #{tpu_custom_call.1} parent=27 // pred_region
          %1657 = vsyncadd %s1649, 0
          %s1658 = smul.addr %s20, 3
          %s1659 = smul.addr %s1658, 8
          %s1660 = scalar_lea.hbm %s2, %s1659
          %s1661 = sshll.u32 %s1652, 4
          %s1662 = int_to_ptr.vmem [resolvable:$true] %s1661
          %s1663 = sshll.u32 %s1660, 4
          %s1664 = int_to_ptr.hbm [resolvable:$true] %s1663
          %1669 = dma.vmem_to_hbm [thread:$0]  %s1662, 384, %s1664, %s1649, 128, 128, 8
        $region40: #{tpu_custom_call.1} parent=27 // pred_fallthru
          _
      $region28: #{tpu_custom_call.1} parent=5 // pred_fallthru
        _
      %p1670 = scmp.le.s32.totalorder 2, %s15
      // Predicated region
      $region41: #{tpu_custom_call.1} parent=5 // pred_check
        %p1671 = pneg %p1670
      $region42: #{tpu_custom_call.1} parent=5 // pred_check_branch
        %1673 = sbr.rel (%p1671) target = $region44
      $region43: #{tpu_custom_call.1} parent=5 // pred_region
        %s1674 = ssub.s32 %s15, 2
        // Predicated region
        $region45: #{tpu_custom_call.1} parent=43 // pred_check
          %p1675 = pneg %p91
        $region46: #{tpu_custom_call.1} parent=43 // pred_check_branch
          %1677 = sbr.rel (%p1675) target = $region48
        $region47: #{tpu_custom_call.1} parent=43 // pred_region
          %s1678 = sand.u32 %s76, 1
          %s1679 = scalar_lea.sflag [#allocation4], %s1678
          %s1680 = sand.u32 %s76, 1
          %s1681 = smul.addr %s1680, 24
          %s1682 = scalar_lea.vmem [#allocation7], %s1681
          %1684 = dma.done %s1679, 384
        $region48: #{tpu_custom_call.1} parent=43 // pred_fallthru
          _
      $region44: #{tpu_custom_call.1} parent=5 // pred_fallthru
        _
    $region6: #{tpu_custom_call.1} parent=1 // loop_footer
      %s19 = sadd.s32 1, %s15
    $region7: #{tpu_custom_call.1} parent=1 // loop_footer_branch
      %14 = sbr.rel target = $region3
    $region8: #{tpu_custom_call.1} parent=1 // loop_exit
      _
    %1685 = vsyncpa [#allocation3], 1
    %s1686 = scalar_lea.sflag [#allocation3], 1
    %1687 = vsyncpa %s1686, 1
    %1688 = vsyncpa [#allocation4], 1
    %s1689 = scalar_lea.sflag [#allocation4], 1
    %1690 = vsyncpa %s1689, 1
    %1691 = vsyncpa [#allocation5], 1
    %s1692 = scalar_lea.sflag [#allocation5], 1
    %1693 = vsyncpa %s1692, 1

</llo_original>
